<compile_context>
chip_gen: v7x
topology: tpu7x:2x2x1
jax: 0.10.0
libtpu: 0.0.40
codegen_flags: <defaults>
</compile_context>

<pallas_src>
import numpy as np
import jax
import jax.numpy as jnp
from jax.experimental import pallas as pl
from jax.experimental.pallas import tpu as pltpu

BN_EPS = 1e-5
HW_IN = 28          # GEmodule hard-codes Upsample(size=(28,28)) + residual mul
_HI = jax.lax.Precision.HIGHEST   # reference check only


def _conv_out(n):   # 3x3 kernel, stride 2, pad 1
    return (n + 2 - 3) // 2 + 1


# ------------------------------------------------------------------- kernel --

def _gemodule_kernel(p1_ref, xres_ref, w_ref, b_ref, g2_ref, g3_ref, up_ref,
                     o_ref, gbuf2_ref, gbuf3_ref):
    """Fused GEmodule forward for the whole (batch-stacked) minibatch.

    Every tile is 2-D with (batch*channel) rows on sublanes and flattened
    spatial positions on lanes; all matmuls are single-pass bf16 MXU ops with
    f32 accumulation and the only HBM write is the lane-dense (NC, 784) f32
    output."""
    nc = w_ref.shape[1]

    # ---- stage 1: DW+PW conv + BN folded into one (NC, 9NC) @ (9NC, 196) ----
    h = jnp.dot(w_ref[0], p1_ref[...], preferred_element_type=jnp.float32)
    h = jnp.maximum(h + b_ref[0], 0.0)                          # (NC, 196) f32

    # ---- stages 2 & 3: stride-2 im2col via 9 exact 0/1 gather matmuls,
    #      stacked on sublanes, then ONE (NC, 9NC) weight matmul -------------
    def dwconv_stage(x, w, bias, g_ref, gbuf_ref):
        xb = x.astype(jnp.bfloat16)
        for t in range(9):                                      # static unroll
            tile = jnp.dot(xb, g_ref[t],                        # (NC, Mout)
                           preferred_element_type=jnp.float32)
            gbuf_ref[t * nc:(t + 1) * nc, :] = tile.astype(jnp.bfloat16)
        out = jnp.dot(w, gbuf_ref[...],                         # (NC, Mout)
                      preferred_element_type=jnp.float32)
        return jnp.maximum(out + bias, 0.0)

    h = dwconv_stage(h, w_ref[1], b_ref[1], g2_ref, gbuf2_ref)  # (NC, 49)
    h = dwconv_stage(h, w_ref[2], b_ref[2], g3_ref, gbuf3_ref)  # (NC, 16)

    # ---- bilinear upsample to 28x28, sigmoid gate, residual -----------------
    up = jnp.dot(h.astype(jnp.bfloat16), up_ref[...],
                 preferred_element_type=jnp.float32)            # (NC, 784)
    gate = jax.nn.sigmoid(up)
    o_ref[...] = (xres_ref[...] * (1.0 + gate)).astype(o_ref.dtype)   # r*g + r


# -------------------------------------------------------------- pallas call --

def _gemodule_pallas(p1, xres, params):
    NC, S = xres.shape
    w, b = params["w"], params["b"]
    g2, g3, up = params["g2"], params["g3"], params["up"]
    K1, M1 = p1.shape                    # (9*NC, 196)
    t9, m2_in, m2 = g2.shape
    _, m3_in, m3 = g3.shape

    flops = 2 * (NC * K1 * M1                                   # stage-1 weight
                 + t9 * NC * m2_in * m2 + NC * K1 * m2          # stage-2
                 + t9 * NC * m3_in * m3 + NC * K1 * m3          # stage-3
                 + NC * m3 * S)                                 # upsample

    def _nb(a):
        return int(a.size) * a.dtype.itemsize

    bytes_accessed = (_nb(p1) + _nb(xres) + _nb(w) + _nb(b) + _nb(g2)
                      + _nb(g3) + _nb(up) + NC * S * 4)

    return pl.pallas_call(
        _gemodule_kernel,
        out_shape=jax.ShapeDtypeStruct((NC, S), jnp.float32),
        # No grid: a single step with whole arrays resident in VMEM (~1 MB
        # total, far under every generation's limit) - no per-step overhead,
        # no redundant double-buffering of constants.
        scratch_shapes=[
            pltpu.VMEM((t9 * NC, m2), jnp.bfloat16),   # stage-2 gathered block
            pltpu.VMEM((t9 * NC, m3), jnp.bfloat16),   # stage-3 gathered block
        ],
        cost_estimate=pl.CostEstimate(
            flops=int(flops),
            transcendentals=int(NC * S),               # sigmoid exp per output
            bytes_accessed=int(bytes_accessed)),
    )(p1, xres, w, b, g2, g3, up)


# ----------------------------------------------------------------- JAX glue --

def _stage1_patches(x):
    """Transposed im2col for the first stride-2 DWConv: rows = (tap, batch,
    channel), lanes = flattened output positions.  One small XLA pad+slice
    fusion on the raw NCHW input feeding the fused kernel."""
    N, C, H, W = x.shape
    Ho, Wo = _conv_out(H), _conv_out(W)
    xp = jnp.pad(x, ((0, 0), (0, 0), (1, 1), (1, 1)))
    taps = [xp[:, :, kh:kh + 2 * Ho:2, kw:kw + 2 * Wo:2]
            for kh in range(3) for kw in range(3)]
    p = jnp.stack(taps, axis=0)                       # (9, N, C, Ho, Wo)
    return p.reshape(9 * N * C, Ho * Wo)              # row = t*NC + n*C + c


def _tap_gather_mats(hw):
    """(9, HW*HW, Ho*Wo) 0/1 matrices: column q of tap (kh,kw) selects the
    input position feeding output q of a 3x3 / stride-2 / pad-1 conv
    (all-zero column where the tap falls in the zero padding)."""
    H = W = hw
    Ho, Wo = _conv_out(H), _conv_out(W)
    g = np.zeros((9, H * W, Ho * Wo), np.float32)
    for kh in range(3):
        for kw in range(3):
            t = kh * 3 + kw
            for oh in range(Ho):
                ih = 2 * oh - 1 + kh
                if ih < 0 or ih >= H:
                    continue
                for ow in range(Wo):
                    iw = 2 * ow - 1 + kw
                    if iw < 0 or iw >= W:
                        continue
                    g[t, ih * W + iw, oh * Wo + ow] = 1.0
    return jnp.asarray(g)


def _bilinear_matrix(out_size, in_size):
    """Row-interpolation matrix matching nn.Upsample(mode='bilinear',
    align_corners=False)."""
    scale = in_size / out_size
    o = np.arange(out_size, dtype=np.float64)
    src = np.maximum(scale * (o + 0.5) - 0.5, 0.0)
    i0 = np.minimum(np.floor(src).astype(np.int64), in_size - 1)
    i1 = np.minimum(i0 + 1, in_size - 1)
    frac = src - i0
    w = np.zeros((out_size, in_size), np.float64)
    w[np.arange(out_size), i0] += 1.0 - frac
    w[np.arange(out_size), i1] += frac
    return w.astype(np.float32)


def _pack_blockdiag_taps(w_taps, batch):
    """(9, C, C) per-tap weights -> (NC, 9*NC) block-diagonal weight whose
    column index is t*NC + n*C + ci, matching the gathered-block row order."""
    t9, co, ci = w_taps.shape
    eye = jnp.eye(batch, dtype=w_taps.dtype)
    bd = jnp.einsum("nm,tij->tnimj", eye, w_taps)
    bd = bd.reshape(t9, batch * co, batch * ci)
    return jnp.transpose(bd, (1, 0, 2)).reshape(batch * co, t9 * batch * ci)


def init_gemodule_params(key, inchannal, outchannal, batch):
    """Deterministic synthetic DWConv/BN parameters, pre-folded and pre-packed
    (batch folded into sublane rows, BN scale folded into weights, constants
    stored in bf16).  Returns (kernel_params, reference_params)."""
    assert inchannal == outchannal, "GEmodule residual requires in == out channels"
    C = inchannal
    NC = batch * C
    sizes = [HW_IN, _conv_out(HW_IN), _conv_out(_conv_out(HW_IN))]   # 28, 14, 7
    w_list, b_list, ref_stages = [], [], []
    for i in range(3):
        keys = jax.random.split(jax.random.fold_in(key, i), 6)
        dw = 0.3 * jax.random.normal(keys[0], (3, 3, C), jnp.float32)       # depthwise
        pw = jax.random.normal(keys[1], (C, C), jnp.float32) / jnp.sqrt(C)  # pointwise
        gamma = 1.0 + 0.1 * jax.random.normal(keys[2], (C,), jnp.float32)
        beta = 0.1 * jax.random.normal(keys[3], (C,), jnp.float32)
        mean = 0.1 * jax.random.normal(keys[4], (C,), jnp.float32)
        var = 0.5 + jnp.abs(jax.random.normal(keys[5], (C,), jnp.float32))
        scale = gamma / jnp.sqrt(var + BN_EPS)        # eval-mode BatchNorm fold
        shift = beta - mean * scale
        dwf = dw.reshape(9, C)                        # [kh*3+kw, ci]
        # Per-tap (Cout, Cin) weights with the BN scale folded in:
        #   W[t, co, ci] = scale[co] * pw[ci, co] * dw[kh, kw, ci]
        w_taps = scale[None, :, None] * pw.T[None, :, :] * dwf[:, None, :]
        w_list.append(_pack_blockdiag_taps(w_taps, batch))     # (NC, 9*NC)
        b_list.append(jnp.tile(shift, batch).reshape(NC, 1))   # (NC, 1)
        ref_stages.append((dw, pw, scale, shift))
    params = {
        "w": jnp.stack(w_list).astype(jnp.bfloat16),            # (3, NC, 9NC)
        "b": jnp.stack(b_list).astype(jnp.float32),             # (3, NC, 1)
        "g2": _tap_gather_mats(sizes[1]).astype(jnp.bfloat16),  # (9, 196, 49)
        "g3": _tap_gather_mats(sizes[2]).astype(jnp.bfloat16),  # (9, 49, 16)
    }
    # Bilinear upsample (4,4)->(28,28) as one matmul: up = h3 @ U with
    # U = kron(Wh, Ww)^T, built once here (nothing extra in the forward graph).
    s3 = _conv_out(sizes[2])                          # 4
    wh = _bilinear_matrix(HW_IN, s3)
    ww = _bilinear_matrix(HW_IN, s3)
    params["up"] = jnp.asarray(np.kron(wh, ww).T).astype(jnp.bfloat16)  # (16, 784)
    ref = {"stages": ref_stages, "wh": jnp.asarray(wh), "ww": jnp.asarray(ww)}
    return params, ref


def gemodule_forward(x_nchw, params):
    """GEmodule forward.  I/O are NCHW; the kernel keeps (batch*channel) on
    sublanes and flat spatial positions on lanes, so no transposes anywhere."""
    N, C, H, W = x_nchw.shape
    assert H == HW_IN and W == HW_IN, "GEmodule requires a 28x28 input"
    assert params["w"].shape[1] == N * C, "params were packed for a different batch"
    x = x_nchw.astype(jnp.float32)
    p1 = _stage1_patches(x).astype(jnp.bfloat16)     # (9*NC, 196) bf16
    xres = x.reshape(N * C, H * W)                   # (NC, 784) f32, free reshape
    out = _gemodule_pallas(p1, xres, params)         # (NC, 784) f32
    # TODO(synk): nn.Dropout() between stages only acts in training; it is the
    # identity at inference, which is what this kernel implements.
    return out.reshape(N, C, H, W)


# -------------------------------------------------- pure-JAX reference check --

def _reference_forward(x, ref):
    h = x
    for (dw, pw, scale, shift) in ref["stages"]:
        C = h.shape[1]
        h = jax.lax.conv_general_dilated(
            h, dw[:, :, None, :], window_strides=(2, 2), padding=((1, 1), (1, 1)),
            dimension_numbers=("NCHW", "HWIO", "NCHW"),
            feature_group_count=C, precision=_HI)
        h = jax.lax.conv_general_dilated(
            h, pw[None, None, :, :], window_strides=(1, 1), padding="VALID",
            dimension_numbers=("NCHW", "HWIO", "NCHW"), precision=_HI)
        h = h * scale[None, :, None, None] + shift[None, :, None, None]
        h = jnp.maximum(h, 0.0)
    up = jnp.einsum("ia,ncab,jb->ncij", ref["wh"], h, ref["ww"], precision=_HI)
    g = jax.nn.sigmoid(up)
    return x * g + x


if __name__ == "__main__":
    key = jax.random.PRNGKey(0)
    kx, kp = jax.random.split(key)
    # Upsample(size=(28,28)) + the residual multiply force a 28x28 input with
    # inchannal == outchannal.
    N, C = 2, 8
    x = jax.random.normal(kx, (N, C, HW_IN, HW_IN), jnp.float32)
    params, ref = init_gemodule_params(kp, C, C, batch=N)

    fwd = jax.jit(gemodule_forward)
    out = jax.block_until_ready(fwd(x, params))
    assert out.shape == (N, C, HW_IN, HW_IN) and out.dtype == jnp.float32

    expected = _reference_forward(x, ref)
    assert bool(jnp.all(jnp.isfinite(out)))
    # bf16 MXU path (default precision) vs. f32 HIGHEST reference: expected
    # relative error ~1e-3; tolerance below is comfortably above that.
    err = float(jnp.max(jnp.abs(out - expected)))
    assert bool(jnp.allclose(out, expected, atol=4e-2, rtol=4e-2)), (
        f"mismatch vs reference: max abs err {err}")
    print("KERNEL_OK")
</pallas_src>

<mosaic_0001>
module attributes {stable_mosaic.version = 11 : i64} {
  func.func @_gemodule_kernel(%arg0: memref<144x196xbf16, #tpu.memory_space<vmem>>, %arg1: memref<16x784xf32, #tpu.memory_space<vmem>>, %arg2: memref<3x16x144xbf16, #tpu.memory_space<vmem>>, %arg3: memref<3x16x1xf32, #tpu.memory_space<vmem>>, %arg4: memref<9x196x49xbf16, #tpu.memory_space<vmem>>, %arg5: memref<9x49x16xbf16, #tpu.memory_space<vmem>>, %arg6: memref<16x784xbf16, #tpu.memory_space<vmem>>, %arg7: memref<16x784xf32, #tpu.memory_space<vmem>>, %arg8: memref<144x49xbf16, #tpu.memory_space<vmem>>, %arg9: memref<144x16xbf16, #tpu.memory_space<vmem>>) attributes {dimension_semantics = [], scalar_prefetch = 0 : i64, scratch_operands = 2 : i64, tpu.core_type = #tpu.core_type<tc>} {
    %c0 = arith.constant 0 : index
    %c0_0 = arith.constant 0 : index
    %c0_1 = arith.constant 0 : index
    %0 = vector.load %arg2[%c0, %c0_0, %c0_1] : memref<3x16x144xbf16, #tpu.memory_space<vmem>>, vector<1x16x144xbf16>
    %1 = vector.shape_cast %0 : vector<1x16x144xbf16> to vector<16x144xbf16>
    %c0_2 = arith.constant 0 : index
    %c0_3 = arith.constant 0 : index
    %2 = vector.load %arg0[%c0_2, %c0_3] : memref<144x196xbf16, #tpu.memory_space<vmem>>, vector<144x196xbf16>
    %cst = arith.constant dense<0.000000e+00> : vector<16x196xf32>
    %3 = tpu.matmul %1, %2, %cst {dimension_numbers = #tpu.dot_dimension_numbers<[1], [0], [0], [1], [0, 0, 1, 1], [], []>} : vector<16x144xbf16>, vector<144x196xbf16>, vector<16x196xf32> -> vector<16x196xf32>
    %c0_4 = arith.constant 0 : index
    %c0_5 = arith.constant 0 : index
    %c0_6 = arith.constant 0 : index
    %4 = vector.load %arg3[%c0_4, %c0_5, %c0_6] : memref<3x16x1xf32, #tpu.memory_space<vmem>>, vector<1x16x1xf32>
    %5 = vector.shape_cast %4 : vector<1x16x1xf32> to vector<16x1xf32>
    %6 = vector.broadcast %5 : vector<16x1xf32> to vector<16x196xf32>
    %7 = arith.addf %3, %6 : vector<16x196xf32>
    %cst_7 = arith.constant 0.000000e+00 : f32
    %8 = vector.broadcast %cst_7 : f32 to vector<16x196xf32>
    %9 = arith.maximumf %7, %8 : vector<16x196xf32>
    %c1 = arith.constant 1 : index
    %c0_8 = arith.constant 0 : index
    %c0_9 = arith.constant 0 : index
    %10 = vector.load %arg2[%c1, %c0_8, %c0_9] : memref<3x16x144xbf16, #tpu.memory_space<vmem>>, vector<1x16x144xbf16>
    %11 = vector.shape_cast %10 : vector<1x16x144xbf16> to vector<16x144xbf16>
    %c1_10 = arith.constant 1 : index
    %c0_11 = arith.constant 0 : index
    %c0_12 = arith.constant 0 : index
    %12 = vector.load %arg3[%c1_10, %c0_11, %c0_12] : memref<3x16x1xf32, #tpu.memory_space<vmem>>, vector<1x16x1xf32>
    %13 = vector.shape_cast %12 : vector<1x16x1xf32> to vector<16x1xf32>
    %14 = arith.truncf %9 : vector<16x196xf32> to vector<16x196xbf16>
    %c0_13 = arith.constant 0 : index
    %c0_14 = arith.constant 0 : index
    %c0_15 = arith.constant 0 : index
    %15 = vector.load %arg4[%c0_13, %c0_14, %c0_15] : memref<9x196x49xbf16, #tpu.memory_space<vmem>>, vector<1x196x49xbf16>
    %16 = vector.shape_cast %15 : vector<1x196x49xbf16> to vector<196x49xbf16>
    %cst_16 = arith.constant dense<0.000000e+00> : vector<16x49xf32>
    %17 = tpu.matmul %14, %16, %cst_16 {dimension_numbers = #tpu.dot_dimension_numbers<[1], [0], [0], [1], [0, 0, 1, 1], [], []>} : vector<16x196xbf16>, vector<196x49xbf16>, vector<16x49xf32> -> vector<16x49xf32>
    %18 = arith.truncf %17 : vector<16x49xf32> to vector<16x49xbf16>
    %c0_17 = arith.constant 0 : index
    %c0_18 = arith.constant 0 : index
    %19 = vector.load %arg8[%c0_17, %c0_18] : memref<144x49xbf16, #tpu.memory_space<vmem>>, vector<16x49xbf16>
    tpu.vector_store %arg8[%c0_17, %c0_18], %18 {strides = array<i32>} : memref<144x49xbf16, #tpu.memory_space<vmem>>, vector<16x49xbf16>,
    %c1_19 = arith.constant 1 : index
    %c0_20 = arith.constant 0 : index
    %c0_21 = arith.constant 0 : index
    %20 = vector.load %arg4[%c1_19, %c0_20, %c0_21] : memref<9x196x49xbf16, #tpu.memory_space<vmem>>, vector<1x196x49xbf16>
    %21 = vector.shape_cast %20 : vector<1x196x49xbf16> to vector<196x49xbf16>
    %cst_22 = arith.constant dense<0.000000e+00> : vector<16x49xf32>
    %22 = tpu.matmul %14, %21, %cst_22 {dimension_numbers = #tpu.dot_dimension_numbers<[1], [0], [0], [1], [0, 0, 1, 1], [], []>} : vector<16x196xbf16>, vector<196x49xbf16>, vector<16x49xf32> -> vector<16x49xf32>
    %23 = arith.truncf %22 : vector<16x49xf32> to vector<16x49xbf16>
    %c16 = arith.constant 16 : index
    %c0_23 = arith.constant 0 : index
    %24 = vector.load %arg8[%c16, %c0_23] : memref<144x49xbf16, #tpu.memory_space<vmem>>, vector<16x49xbf16>
    tpu.vector_store %arg8[%c16, %c0_23], %23 {strides = array<i32>} : memref<144x49xbf16, #tpu.memory_space<vmem>>, vector<16x49xbf16>,
    %c2 = arith.constant 2 : index
    %c0_24 = arith.constant 0 : index
    %c0_25 = arith.constant 0 : index
    %25 = vector.load %arg4[%c2, %c0_24, %c0_25] : memref<9x196x49xbf16, #tpu.memory_space<vmem>>, vector<1x196x49xbf16>
    %26 = vector.shape_cast %25 : vector<1x196x49xbf16> to vector<196x49xbf16>
    %cst_26 = arith.constant dense<0.000000e+00> : vector<16x49xf32>
    %27 = tpu.matmul %14, %26, %cst_26 {dimension_numbers = #tpu.dot_dimension_numbers<[1], [0], [0], [1], [0, 0, 1, 1], [], []>} : vector<16x196xbf16>, vector<196x49xbf16>, vector<16x49xf32> -> vector<16x49xf32>
    %28 = arith.truncf %27 : vector<16x49xf32> to vector<16x49xbf16>
    %c32 = arith.constant 32 : index
    %c0_27 = arith.constant 0 : index
    %29 = vector.load %arg8[%c32, %c0_27] : memref<144x49xbf16, #tpu.memory_space<vmem>>, vector<16x49xbf16>
    tpu.vector_store %arg8[%c32, %c0_27], %28 {strides = array<i32>} : memref<144x49xbf16, #tpu.memory_space<vmem>>, vector<16x49xbf16>,
    %c3 = arith.constant 3 : index
    %c0_28 = arith.constant 0 : index
    %c0_29 = arith.constant 0 : index
    %30 = vector.load %arg4[%c3, %c0_28, %c0_29] : memref<9x196x49xbf16, #tpu.memory_space<vmem>>, vector<1x196x49xbf16>
    %31 = vector.shape_cast %30 : vector<1x196x49xbf16> to vector<196x49xbf16>
    %cst_30 = arith.constant dense<0.000000e+00> : vector<16x49xf32>
    %32 = tpu.matmul %14, %31, %cst_30 {dimension_numbers = #tpu.dot_dimension_numbers<[1], [0], [0], [1], [0, 0, 1, 1], [], []>} : vector<16x196xbf16>, vector<196x49xbf16>, vector<16x49xf32> -> vector<16x49xf32>
    %33 = arith.truncf %32 : vector<16x49xf32> to vector<16x49xbf16>
    %c48 = arith.constant 48 : index
    %c0_31 = arith.constant 0 : index
    %34 = vector.load %arg8[%c48, %c0_31] : memref<144x49xbf16, #tpu.memory_space<vmem>>, vector<16x49xbf16>
    tpu.vector_store %arg8[%c48, %c0_31], %33 {strides = array<i32>} : memref<144x49xbf16, #tpu.memory_space<vmem>>, vector<16x49xbf16>,
    %c4 = arith.constant 4 : index
    %c0_32 = arith.constant 0 : index
    %c0_33 = arith.constant 0 : index
    %35 = vector.load %arg4[%c4, %c0_32, %c0_33] : memref<9x196x49xbf16, #tpu.memory_space<vmem>>, vector<1x196x49xbf16>
    %36 = vector.shape_cast %35 : vector<1x196x49xbf16> to vector<196x49xbf16>
    %cst_34 = arith.constant dense<0.000000e+00> : vector<16x49xf32>
    %37 = tpu.matmul %14, %36, %cst_34 {dimension_numbers = #tpu.dot_dimension_numbers<[1], [0], [0], [1], [0, 0, 1, 1], [], []>} : vector<16x196xbf16>, vector<196x49xbf16>, vector<16x49xf32> -> vector<16x49xf32>
    %38 = arith.truncf %37 : vector<16x49xf32> to vector<16x49xbf16>
    %c64 = arith.constant 64 : index
    %c0_35 = arith.constant 0 : index
    %39 = vector.load %arg8[%c64, %c0_35] : memref<144x49xbf16, #tpu.memory_space<vmem>>, vector<16x49xbf16>
    tpu.vector_store %arg8[%c64, %c0_35], %38 {strides = array<i32>} : memref<144x49xbf16, #tpu.memory_space<vmem>>, vector<16x49xbf16>,
    %c5 = arith.constant 5 : index
    %c0_36 = arith.constant 0 : index
    %c0_37 = arith.constant 0 : index
    %40 = vector.load %arg4[%c5, %c0_36, %c0_37] : memref<9x196x49xbf16, #tpu.memory_space<vmem>>, vector<1x196x49xbf16>
    %41 = vector.shape_cast %40 : vector<1x196x49xbf16> to vector<196x49xbf16>
    %cst_38 = arith.constant dense<0.000000e+00> : vector<16x49xf32>
    %42 = tpu.matmul %14, %41, %cst_38 {dimension_numbers = #tpu.dot_dimension_numbers<[1], [0], [0], [1], [0, 0, 1, 1], [], []>} : vector<16x196xbf16>, vector<196x49xbf16>, vector<16x49xf32> -> vector<16x49xf32>
    %43 = arith.truncf %42 : vector<16x49xf32> to vector<16x49xbf16>
    %c80 = arith.constant 80 : index
    %c0_39 = arith.constant 0 : index
    %44 = vector.load %arg8[%c80, %c0_39] : memref<144x49xbf16, #tpu.memory_space<vmem>>, vector<16x49xbf16>
    tpu.vector_store %arg8[%c80, %c0_39], %43 {strides = array<i32>} : memref<144x49xbf16, #tpu.memory_space<vmem>>, vector<16x49xbf16>,
    %c6 = arith.constant 6 : index
    %c0_40 = arith.constant 0 : index
    %c0_41 = arith.constant 0 : index
    %45 = vector.load %arg4[%c6, %c0_40, %c0_41] : memref<9x196x49xbf16, #tpu.memory_space<vmem>>, vector<1x196x49xbf16>
    %46 = vector.shape_cast %45 : vector<1x196x49xbf16> to vector<196x49xbf16>
    %cst_42 = arith.constant dense<0.000000e+00> : vector<16x49xf32>
    %47 = tpu.matmul %14, %46, %cst_42 {dimension_numbers = #tpu.dot_dimension_numbers<[1], [0], [0], [1], [0, 0, 1, 1], [], []>} : vector<16x196xbf16>, vector<196x49xbf16>, vector<16x49xf32> -> vector<16x49xf32>
    %48 = arith.truncf %47 : vector<16x49xf32> to vector<16x49xbf16>
    %c96 = arith.constant 96 : index
    %c0_43 = arith.constant 0 : index
    %49 = vector.load %arg8[%c96, %c0_43] : memref<144x49xbf16, #tpu.memory_space<vmem>>, vector<16x49xbf16>
    tpu.vector_store %arg8[%c96, %c0_43], %48 {strides = array<i32>} : memref<144x49xbf16, #tpu.memory_space<vmem>>, vector<16x49xbf16>,
    %c7 = arith.constant 7 : index
    %c0_44 = arith.constant 0 : index
    %c0_45 = arith.constant 0 : index
    %50 = vector.load %arg4[%c7, %c0_44, %c0_45] : memref<9x196x49xbf16, #tpu.memory_space<vmem>>, vector<1x196x49xbf16>
    %51 = vector.shape_cast %50 : vector<1x196x49xbf16> to vector<196x49xbf16>
    %cst_46 = arith.constant dense<0.000000e+00> : vector<16x49xf32>
    %52 = tpu.matmul %14, %51, %cst_46 {dimension_numbers = #tpu.dot_dimension_numbers<[1], [0], [0], [1], [0, 0, 1, 1], [], []>} : vector<16x196xbf16>, vector<196x49xbf16>, vector<16x49xf32> -> vector<16x49xf32>
    %53 = arith.truncf %52 : vector<16x49xf32> to vector<16x49xbf16>
    %c112 = arith.constant 112 : index
    %c0_47 = arith.constant 0 : index
    %54 = vector.load %arg8[%c112, %c0_47] : memref<144x49xbf16, #tpu.memory_space<vmem>>, vector<16x49xbf16>
    tpu.vector_store %arg8[%c112, %c0_47], %53 {strides = array<i32>} : memref<144x49xbf16, #tpu.memory_space<vmem>>, vector<16x49xbf16>,
    %c8 = arith.constant 8 : index
    %c0_48 = arith.constant 0 : index
    %c0_49 = arith.constant 0 : index
    %55 = vector.load %arg4[%c8, %c0_48, %c0_49] : memref<9x196x49xbf16, #tpu.memory_space<vmem>>, vector<1x196x49xbf16>
    %56 = vector.shape_cast %55 : vector<1x196x49xbf16> to vector<196x49xbf16>
    %cst_50 = arith.constant dense<0.000000e+00> : vector<16x49xf32>
    %57 = tpu.matmul %14, %56, %cst_50 {dimension_numbers = #tpu.dot_dimension_numbers<[1], [0], [0], [1], [0, 0, 1, 1], [], []>} : vector<16x196xbf16>, vector<196x49xbf16>, vector<16x49xf32> -> vector<16x49xf32>
    %58 = arith.truncf %57 : vector<16x49xf32> to vector<16x49xbf16>
    %c128 = arith.constant 128 : index
    %c0_51 = arith.constant 0 : index
    %59 = vector.load %arg8[%c128, %c0_51] : memref<144x49xbf16, #tpu.memory_space<vmem>>, vector<16x49xbf16>
    tpu.vector_store %arg8[%c128, %c0_51], %58 {strides = array<i32>} : memref<144x49xbf16, #tpu.memory_space<vmem>>, vector<16x49xbf16>,
    %c0_52 = arith.constant 0 : index
    %c0_53 = arith.constant 0 : index
    %60 = vector.load %arg8[%c0_52, %c0_53] : memref<144x49xbf16, #tpu.memory_space<vmem>>, vector<144x49xbf16>
    %cst_54 = arith.constant dense<0.000000e+00> : vector<16x49xf32>
    %61 = tpu.matmul %11, %60, %cst_54 {dimension_numbers = #tpu.dot_dimension_numbers<[1], [0], [0], [1], [0, 0, 1, 1], [], []>} : vector<16x144xbf16>, vector<144x49xbf16>, vector<16x49xf32> -> vector<16x49xf32>
    %62 = vector.broadcast %13 : vector<16x1xf32> to vector<16x49xf32>
    %63 = arith.addf %61, %62 : vector<16x49xf32>
    %cst_55 = arith.constant 0.000000e+00 : f32
    %64 = vector.broadcast %cst_55 : f32 to vector<16x49xf32>
    %65 = arith.maximumf %63, %64 : vector<16x49xf32>
    %c2_56 = arith.constant 2 : index
    %c0_57 = arith.constant 0 : index
    %c0_58 = arith.constant 0 : index
    %66 = vector.load %arg2[%c2_56, %c0_57, %c0_58] : memref<3x16x144xbf16, #tpu.memory_space<vmem>>, vector<1x16x144xbf16>
    %67 = vector.shape_cast %66 : vector<1x16x144xbf16> to vector<16x144xbf16>
    %c2_59 = arith.constant 2 : index
    %c0_60 = arith.constant 0 : index
    %c0_61 = arith.constant 0 : index
    %68 = vector.load %arg3[%c2_59, %c0_60, %c0_61] : memref<3x16x1xf32, #tpu.memory_space<vmem>>, vector<1x16x1xf32>
    %69 = vector.shape_cast %68 : vector<1x16x1xf32> to vector<16x1xf32>
    %70 = arith.truncf %65 : vector<16x49xf32> to vector<16x49xbf16>
    %c0_62 = arith.constant 0 : index
    %c0_63 = arith.constant 0 : index
    %c0_64 = arith.constant 0 : index
    %71 = vector.load %arg5[%c0_62, %c0_63, %c0_64] : memref<9x49x16xbf16, #tpu.memory_space<vmem>>, vector<1x49x16xbf16>
    %72 = vector.shape_cast %71 : vector<1x49x16xbf16> to vector<49x16xbf16>
    %cst_65 = arith.constant dense<0.000000e+00> : vector<16x16xf32>
    %73 = tpu.matmul %70, %72, %cst_65 {dimension_numbers = #tpu.dot_dimension_numbers<[1], [0], [0], [1], [0, 0, 1, 1], [], []>} : vector<16x49xbf16>, vector<49x16xbf16>, vector<16x16xf32> -> vector<16x16xf32>
    %74 = arith.truncf %73 : vector<16x16xf32> to vector<16x16xbf16>
    %c0_66 = arith.constant 0 : index
    %c0_67 = arith.constant 0 : index
    %75 = vector.load %arg9[%c0_66, %c0_67] : memref<144x16xbf16, #tpu.memory_space<vmem>>, vector<16x16xbf16>
    tpu.vector_store %arg9[%c0_66, %c0_67], %74 {strides = array<i32>} : memref<144x16xbf16, #tpu.memory_space<vmem>>, vector<16x16xbf16>,
    %c1_68 = arith.constant 1 : index
    %c0_69 = arith.constant 0 : index
    %c0_70 = arith.constant 0 : index
    %76 = vector.load %arg5[%c1_68, %c0_69, %c0_70] : memref<9x49x16xbf16, #tpu.memory_space<vmem>>, vector<1x49x16xbf16>
    %77 = vector.shape_cast %76 : vector<1x49x16xbf16> to vector<49x16xbf16>
    %cst_71 = arith.constant dense<0.000000e+00> : vector<16x16xf32>
    %78 = tpu.matmul %70, %77, %cst_71 {dimension_numbers = #tpu.dot_dimension_numbers<[1], [0], [0], [1], [0, 0, 1, 1], [], []>} : vector<16x49xbf16>, vector<49x16xbf16>, vector<16x16xf32> -> vector<16x16xf32>
    %79 = arith.truncf %78 : vector<16x16xf32> to vector<16x16xbf16>
    %c16_72 = arith.constant 16 : index
    %c0_73 = arith.constant 0 : index
    %80 = vector.load %arg9[%c16_72, %c0_73] : memref<144x16xbf16, #tpu.memory_space<vmem>>, vector<16x16xbf16>
    tpu.vector_store %arg9[%c16_72, %c0_73], %79 {strides = array<i32>} : memref<144x16xbf16, #tpu.memory_space<vmem>>, vector<16x16xbf16>,
    %c2_74 = arith.constant 2 : index
    %c0_75 = arith.constant 0 : index
    %c0_76 = arith.constant 0 : index
    %81 = vector.load %arg5[%c2_74, %c0_75, %c0_76] : memref<9x49x16xbf16, #tpu.memory_space<vmem>>, vector<1x49x16xbf16>
    %82 = vector.shape_cast %81 : vector<1x49x16xbf16> to vector<49x16xbf16>
    %cst_77 = arith.constant dense<0.000000e+00> : vector<16x16xf32>
    %83 = tpu.matmul %70, %82, %cst_77 {dimension_numbers = #tpu.dot_dimension_numbers<[1], [0], [0], [1], [0, 0, 1, 1], [], []>} : vector<16x49xbf16>, vector<49x16xbf16>, vector<16x16xf32> -> vector<16x16xf32>
    %84 = arith.truncf %83 : vector<16x16xf32> to vector<16x16xbf16>
    %c32_78 = arith.constant 32 : index
    %c0_79 = arith.constant 0 : index
    %85 = vector.load %arg9[%c32_78, %c0_79] : memref<144x16xbf16, #tpu.memory_space<vmem>>, vector<16x16xbf16>
    tpu.vector_store %arg9[%c32_78, %c0_79], %84 {strides = array<i32>} : memref<144x16xbf16, #tpu.memory_space<vmem>>, vector<16x16xbf16>,
    %c3_80 = arith.constant 3 : index
    %c0_81 = arith.constant 0 : index
    %c0_82 = arith.constant 0 : index
    %86 = vector.load %arg5[%c3_80, %c0_81, %c0_82] : memref<9x49x16xbf16, #tpu.memory_space<vmem>>, vector<1x49x16xbf16>
    %87 = vector.shape_cast %86 : vector<1x49x16xbf16> to vector<49x16xbf16>
    %cst_83 = arith.constant dense<0.000000e+00> : vector<16x16xf32>
    %88 = tpu.matmul %70, %87, %cst_83 {dimension_numbers = #tpu.dot_dimension_numbers<[1], [0], [0], [1], [0, 0, 1, 1], [], []>} : vector<16x49xbf16>, vector<49x16xbf16>, vector<16x16xf32> -> vector<16x16xf32>
    %89 = arith.truncf %88 : vector<16x16xf32> to vector<16x16xbf16>
    %c48_84 = arith.constant 48 : index
    %c0_85 = arith.constant 0 : index
    %90 = vector.load %arg9[%c48_84, %c0_85] : memref<144x16xbf16, #tpu.memory_space<vmem>>, vector<16x16xbf16>
    tpu.vector_store %arg9[%c48_84, %c0_85], %89 {strides = array<i32>} : memref<144x16xbf16, #tpu.memory_space<vmem>>, vector<16x16xbf16>,
    %c4_86 = arith.constant 4 : index
    %c0_87 = arith.constant 0 : index
    %c0_88 = arith.constant 0 : index
    %91 = vector.load %arg5[%c4_86, %c0_87, %c0_88] : memref<9x49x16xbf16, #tpu.memory_space<vmem>>, vector<1x49x16xbf16>
    %92 = vector.shape_cast %91 : vector<1x49x16xbf16> to vector<49x16xbf16>
    %cst_89 = arith.constant dense<0.000000e+00> : vector<16x16xf32>
    %93 = tpu.matmul %70, %92, %cst_89 {dimension_numbers = #tpu.dot_dimension_numbers<[1], [0], [0], [1], [0, 0, 1, 1], [], []>} : vector<16x49xbf16>, vector<49x16xbf16>, vector<16x16xf32> -> vector<16x16xf32>
    %94 = arith.truncf %93 : vector<16x16xf32> to vector<16x16xbf16>
    %c64_90 = arith.constant 64 : index
    %c0_91 = arith.constant 0 : index
    %95 = vector.load %arg9[%c64_90, %c0_91] : memref<144x16xbf16, #tpu.memory_space<vmem>>, vector<16x16xbf16>
    tpu.vector_store %arg9[%c64_90, %c0_91], %94 {strides = array<i32>} : memref<144x16xbf16, #tpu.memory_space<vmem>>, vector<16x16xbf16>,
    %c5_92 = arith.constant 5 : index
    %c0_93 = arith.constant 0 : index
    %c0_94 = arith.constant 0 : index
    %96 = vector.load %arg5[%c5_92, %c0_93, %c0_94] : memref<9x49x16xbf16, #tpu.memory_space<vmem>>, vector<1x49x16xbf16>
    %97 = vector.shape_cast %96 : vector<1x49x16xbf16> to vector<49x16xbf16>
    %cst_95 = arith.constant dense<0.000000e+00> : vector<16x16xf32>
    %98 = tpu.matmul %70, %97, %cst_95 {dimension_numbers = #tpu.dot_dimension_numbers<[1], [0], [0], [1], [0, 0, 1, 1], [], []>} : vector<16x49xbf16>, vector<49x16xbf16>, vector<16x16xf32> -> vector<16x16xf32>
    %99 = arith.truncf %98 : vector<16x16xf32> to vector<16x16xbf16>
    %c80_96 = arith.constant 80 : index
    %c0_97 = arith.constant 0 : index
    %100 = vector.load %arg9[%c80_96, %c0_97] : memref<144x16xbf16, #tpu.memory_space<vmem>>, vector<16x16xbf16>
    tpu.vector_store %arg9[%c80_96, %c0_97], %99 {strides = array<i32>} : memref<144x16xbf16, #tpu.memory_space<vmem>>, vector<16x16xbf16>,
    %c6_98 = arith.constant 6 : index
    %c0_99 = arith.constant 0 : index
    %c0_100 = arith.constant 0 : index
    %101 = vector.load %arg5[%c6_98, %c0_99, %c0_100] : memref<9x49x16xbf16, #tpu.memory_space<vmem>>, vector<1x49x16xbf16>
    %102 = vector.shape_cast %101 : vector<1x49x16xbf16> to vector<49x16xbf16>
    %cst_101 = arith.constant dense<0.000000e+00> : vector<16x16xf32>
    %103 = tpu.matmul %70, %102, %cst_101 {dimension_numbers = #tpu.dot_dimension_numbers<[1], [0], [0], [1], [0, 0, 1, 1], [], []>} : vector<16x49xbf16>, vector<49x16xbf16>, vector<16x16xf32> -> vector<16x16xf32>
    %104 = arith.truncf %103 : vector<16x16xf32> to vector<16x16xbf16>
    %c96_102 = arith.constant 96 : index
    %c0_103 = arith.constant 0 : index
    %105 = vector.load %arg9[%c96_102, %c0_103] : memref<144x16xbf16, #tpu.memory_space<vmem>>, vector<16x16xbf16>
    tpu.vector_store %arg9[%c96_102, %c0_103], %104 {strides = array<i32>} : memref<144x16xbf16, #tpu.memory_space<vmem>>, vector<16x16xbf16>,
    %c7_104 = arith.constant 7 : index
    %c0_105 = arith.constant 0 : index
    %c0_106 = arith.constant 0 : index
    %106 = vector.load %arg5[%c7_104, %c0_105, %c0_106] : memref<9x49x16xbf16, #tpu.memory_space<vmem>>, vector<1x49x16xbf16>
    %107 = vector.shape_cast %106 : vector<1x49x16xbf16> to vector<49x16xbf16>
    %cst_107 = arith.constant dense<0.000000e+00> : vector<16x16xf32>
    %108 = tpu.matmul %70, %107, %cst_107 {dimension_numbers = #tpu.dot_dimension_numbers<[1], [0], [0], [1], [0, 0, 1, 1], [], []>} : vector<16x49xbf16>, vector<49x16xbf16>, vector<16x16xf32> -> vector<16x16xf32>
    %109 = arith.truncf %108 : vector<16x16xf32> to vector<16x16xbf16>
    %c112_108 = arith.constant 112 : index
    %c0_109 = arith.constant 0 : index
    %110 = vector.load %arg9[%c112_108, %c0_109] : memref<144x16xbf16, #tpu.memory_space<vmem>>, vector<16x16xbf16>
    tpu.vector_store %arg9[%c112_108, %c0_109], %109 {strides = array<i32>} : memref<144x16xbf16, #tpu.memory_space<vmem>>, vector<16x16xbf16>,
    %c8_110 = arith.constant 8 : index
    %c0_111 = arith.constant 0 : index
    %c0_112 = arith.constant 0 : index
    %111 = vector.load %arg5[%c8_110, %c0_111, %c0_112] : memref<9x49x16xbf16, #tpu.memory_space<vmem>>, vector<1x49x16xbf16>
    %112 = vector.shape_cast %111 : vector<1x49x16xbf16> to vector<49x16xbf16>
    %cst_113 = arith.constant dense<0.000000e+00> : vector<16x16xf32>
    %113 = tpu.matmul %70, %112, %cst_113 {dimension_numbers = #tpu.dot_dimension_numbers<[1], [0], [0], [1], [0, 0, 1, 1], [], []>} : vector<16x49xbf16>, vector<49x16xbf16>, vector<16x16xf32> -> vector<16x16xf32>
    %114 = arith.truncf %113 : vector<16x16xf32> to vector<16x16xbf16>
    %c128_114 = arith.constant 128 : index
    %c0_115 = arith.constant 0 : index
    %115 = vector.load %arg9[%c128_114, %c0_115] : memref<144x16xbf16, #tpu.memory_space<vmem>>, vector<16x16xbf16>
    tpu.vector_store %arg9[%c128_114, %c0_115], %114 {strides = array<i32>} : memref<144x16xbf16, #tpu.memory_space<vmem>>, vector<16x16xbf16>,
    %c0_116 = arith.constant 0 : index
    %c0_117 = arith.constant 0 : index
    %116 = vector.load %arg9[%c0_116, %c0_117] : memref<144x16xbf16, #tpu.memory_space<vmem>>, vector<144x16xbf16>
    %cst_118 = arith.constant dense<0.000000e+00> : vector<16x16xf32>
    %117 = tpu.matmul %67, %116, %cst_118 {dimension_numbers = #tpu.dot_dimension_numbers<[1], [0], [0], [1], [0, 0, 1, 1], [], []>} : vector<16x144xbf16>, vector<144x16xbf16>, vector<16x16xf32> -> vector<16x16xf32>
    %118 = vector.broadcast %69 : vector<16x1xf32> to vector<16x16xf32>
    %119 = arith.addf %117, %118 : vector<16x16xf32>
    %cst_119 = arith.constant 0.000000e+00 : f32
    %120 = vector.broadcast %cst_119 : f32 to vector<16x16xf32>
    %121 = arith.maximumf %119, %120 : vector<16x16xf32>
    %122 = arith.truncf %121 : vector<16x16xf32> to vector<16x16xbf16>
    %c0_120 = arith.constant 0 : index
    %c0_121 = arith.constant 0 : index
    %123 = vector.load %arg6[%c0_120, %c0_121] : memref<16x784xbf16, #tpu.memory_space<vmem>>, vector<16x784xbf16>
    %cst_122 = arith.constant dense<0.000000e+00> : vector<16x784xf32>
    %124 = tpu.matmul %122, %123, %cst_122 {dimension_numbers = #tpu.dot_dimension_numbers<[1], [0], [0], [1], [0, 0, 1, 1], [], []>} : vector<16x16xbf16>, vector<16x784xbf16>, vector<16x784xf32> -> vector<16x784xf32>
    %125 = arith.negf %124 : vector<16x784xf32>
    %126 = math.exp %125 : vector<16x784xf32>
    %cst_123 = arith.constant 1.000000e+00 : f32
    %127 = vector.broadcast %cst_123 : f32 to vector<16x784xf32>
    %128 = arith.addf %127, %126 : vector<16x784xf32>
    %129 = arith.divf %127, %128 : vector<16x784xf32>
    %c0_124 = arith.constant 0 : index
    %c0_125 = arith.constant 0 : index
    %130 = vector.load %arg1[%c0_124, %c0_125] : memref<16x784xf32, #tpu.memory_space<vmem>>, vector<16x784xf32>
    %cst_126 = arith.constant 1.000000e+00 : f32
    %131 = vector.broadcast %cst_126 : f32 to vector<16x784xf32>
    %132 = arith.addf %131, %129 : vector<16x784xf32>
    %133 = arith.mulf %130, %132 : vector<16x784xf32>
    %c0_127 = arith.constant 0 : index
    %c0_128 = arith.constant 0 : index
    %134 = vector.load %arg7[%c0_127, %c0_128] : memref<16x784xf32, #tpu.memory_space<vmem>>, vector<16x784xf32>
    tpu.vector_store %arg7[%c0_127, %c0_128], %133 {strides = array<i32>} : memref<16x784xf32, #tpu.memory_space<vmem>>, vector<16x784xf32>,
    return
  }
}

</mosaic_0001>

<llo_original>
// kernel: gemodule_forward.1
$region0: #{gemodule_forward.1}
  #allocation0 [shape = 'u32[]', space=smem, size = 0x4, offset = 0x4, fixed_abs, tag = 'smem constant byte address 0x4 - core index']
  #allocation1 [shape = 'u32[144,128]{1,0:T(1,128)}', space=vmem, size = 0x12000, scoped, tag = 'internal scratch']
  #allocation2 [shape = 'bf16[144,49]{1,0:T(16,128)(2,1)}', space=vmem, size = 0x9000, scoped, tag = 'scratch operand']
  #allocation3 [shape = 'bf16[144,16]{1,0:T(16,128)(2,1)}', space=vmem, size = 0x9000, scoped, tag = 'scratch operand']
  %s0 = inlined_call_operand.vmem [shape: bf16[144,196], index: 0, kind: input, shape index: {}]
  %s1 = inlined_call_operand.vmem [shape: f32[16,784], index: 1, kind: input, shape index: {}]
  %s2 = inlined_call_operand.vmem [shape: bf16[3,16,144], index: 2, kind: input, shape index: {}]
  %s3 = inlined_call_operand.vmem [shape: f32[3,16,1], index: 3, kind: input, shape index: {}]
  %s4 = inlined_call_operand.vmem [shape: bf16[9,196,49], index: 4, kind: input, shape index: {}]
  %s5 = inlined_call_operand.vmem [shape: bf16[9,49,16], index: 5, kind: input, shape index: {}]
  %s6 = inlined_call_operand.vmem [shape: bf16[16,784], index: 6, kind: input, shape index: {}]
  %s7 = inlined_call_operand.vmem [shape: f32[16,784], index: 7, kind: output, shape index: {}]
  %s8 = sld [smem:[#allocation0]]
  $region38: #{gemodule_forward.1} parent=0
    _
  %s10 = ssub.s32 1, %s8
  %s11 = scalar_select 0, %s10, %s8
  // Predicated region
  $region2: #{gemodule_forward.1} parent=0 // pred_check
    _
  $region3: #{gemodule_forward.1} parent=0 // pred_check_branch
    %13 = sbr.rel (0) target = $region5
  $region4: #{gemodule_forward.1} parent=0 // pred_region
    _
  $region5: #{gemodule_forward.1} parent=0 // pred_fallthru
    _
  // Predicated region
  $region6: #{gemodule_forward.1} parent=0 // pred_check
    _
  $region7: #{gemodule_forward.1} parent=0 // pred_check_branch
    %15 = sbr.rel (0) target = $region9
  $region8: #{gemodule_forward.1} parent=0 // pred_region
    _
  $region9: #{gemodule_forward.1} parent=0 // pred_fallthru
    _
  // Predicated region
  $region10: #{gemodule_forward.1} parent=0 // pred_check
    _
  $region11: #{gemodule_forward.1} parent=0 // pred_check_branch
    %17 = sbr.rel (0) target = $region13
  $region12: #{gemodule_forward.1} parent=0 // pred_region
    _
  $region13: #{gemodule_forward.1} parent=0 // pred_fallthru
    _
  // Predicated region
  $region14: #{gemodule_forward.1} parent=0 // pred_check
    _
  $region15: #{gemodule_forward.1} parent=0 // pred_check_branch
    %19 = sbr.rel (0) target = $region17
  $region16: #{gemodule_forward.1} parent=0 // pred_region
    _
  $region17: #{gemodule_forward.1} parent=0 // pred_fallthru
    _
  // Predicated region
  $region18: #{gemodule_forward.1} parent=0 // pred_check
    _
  $region19: #{gemodule_forward.1} parent=0 // pred_check_branch
    %21 = sbr.rel (0) target = $region21
  $region20: #{gemodule_forward.1} parent=0 // pred_region
    _
  $region21: #{gemodule_forward.1} parent=0 // pred_fallthru
    _
  // Predicated region
  $region22: #{gemodule_forward.1} parent=0 // pred_check
    _
  $region23: #{gemodule_forward.1} parent=0 // pred_check_branch
    %23 = sbr.rel (0) target = $region25
  $region24: #{gemodule_forward.1} parent=0 // pred_region
    _
  $region25: #{gemodule_forward.1} parent=0 // pred_fallthru
    _
  // Predicated region
  $region26: #{gemodule_forward.1} parent=0 // pred_check
    _
  $region27: #{gemodule_forward.1} parent=0 // pred_check_branch
    %25 = sbr.rel (0) target = $region29
  $region28: #{gemodule_forward.1} parent=0 // pred_region
    _
  $region29: #{gemodule_forward.1} parent=0 // pred_fallthru
    _
  %v27 = vld [vmem:[%s2] sm:$0xff]
  %v28 = vld [vmem:[%s2 + $0x8] sm:$0xff]
  %v29 = vld [vmem:[%s0] sm:$0xff]
  %v30 = vld [vmem:[%s0 + $0x8] sm:$0xff]
  %v31 = vld [vmem:[%s0 + $0x10] sm:$0xff]
  %v32 = vld [vmem:[%s0 + $0x18] sm:$0xff]
  %v33 = vld [vmem:[%s0 + $0x20] sm:$0xff]
  %v34 = vld [vmem:[%s0 + $0x28] sm:$0xff]
  %v35 = vld [vmem:[%s0 + $0x30] sm:$0xff]
  %v36 = vld [vmem:[%s0 + $0x38] sm:$0xff]
  %v37 = vld [vmem:[%s0 + $0x40] sm:$0xff]
  %v38 = vld [vmem:[%s0 + $0x48] sm:$0xff]
  %v39 = vld [vmem:[%s0 + $0x50] sm:$0xff]
  %v40 = vld [vmem:[%s0 + $0x58] sm:$0xff]
  %v41 = vld [vmem:[%s0 + $0x60] sm:$0xff]
  %v42 = vld [vmem:[%s0 + $0x68] sm:$0xff]
  %v43 = vld [vmem:[%s0 + $0x70] sm:$0xff]
  %v44 = vld [vmem:[%s0 + $0x78] sm:$0xff]
  %v45 = vld [vmem:[%s0 + $0x80] sm:$0xff]
  %v46 = vld [vmem:[%s0 + $0x88] sm:$0xff]
  %v47 = vld [vmem:[%s3] sm:$0xff]
  %v48 = vld [vmem:[%s3 + $0x8] sm:$0xff]
  %50 = vset.pattern.permute.xlu0 0
  %51 = vperm.xlu0 %50, %v47
  %v52 = vpop.permute.xlu0 %51
  %55 = vset.pattern.permute.xlu0 0
  %56 = vperm.xlu0 %55, %v48
  %v57 = vpop.permute.xlu0 %56
  %v61 = vunpack.c.l.b16 %v27
  %v62 = vunpack.c.h.b16 %v27
  %v63 = vunpack.c.l.b16 %v28
  %v64 = vunpack.c.h.b16 %v28
  %v65 = vpack.c.b16 %v63, %v61
  %v66 = vpack.c.b16 %v64, %v62
  %v86 = vunpack.c.l.b16 %v29
  %v87 = vunpack.c.h.b16 %v29
  %v88 = vunpack.c.l.b16 %v30
  %v89 = vunpack.c.h.b16 %v30
  %v90 = vunpack.c.l.b16 %v31
  %v91 = vunpack.c.h.b16 %v31
  %v92 = vunpack.c.l.b16 %v32
  %v93 = vunpack.c.h.b16 %v32
  %v94 = vunpack.c.l.b16 %v33
  %v95 = vunpack.c.h.b16 %v33
  %v96 = vunpack.c.l.b16 %v34
  %v97 = vunpack.c.h.b16 %v34
  %v98 = vunpack.c.l.b16 %v35
  %v99 = vunpack.c.h.b16 %v35
  %v100 = vunpack.c.l.b16 %v36
  %v101 = vunpack.c.h.b16 %v36
  %v102 = vunpack.c.l.b16 %v37
  %v103 = vunpack.c.h.b16 %v37
  %v104 = vunpack.c.l.b16 %v38
  %v105 = vunpack.c.h.b16 %v38
  %v106 = vunpack.c.l.b16 %v39
  %v107 = vunpack.c.h.b16 %v39
  %v108 = vunpack.c.l.b16 %v40
  %v109 = vunpack.c.h.b16 %v40
  %v110 = vunpack.c.l.b16 %v41
  %v111 = vunpack.c.h.b16 %v41
  %v112 = vunpack.c.l.b16 %v42
  %v113 = vunpack.c.h.b16 %v42
  %v114 = vunpack.c.l.b16 %v43
  %v115 = vunpack.c.h.b16 %v43
  %v116 = vunpack.c.l.b16 %v44
  %v117 = vunpack.c.h.b16 %v44
  %v118 = vunpack.c.l.b16 %v45
  %v119 = vunpack.c.h.b16 %v45
  %v120 = vunpack.c.l.b16 %v46
  %v121 = vunpack.c.h.b16 %v46
  %v122 = vpack.c.b16 %v88, %v86
  %v123 = vpack.c.b16 %v89, %v87
  %v124 = vpack.c.b16 %v92, %v90
  %v125 = vpack.c.b16 %v93, %v91
  %v126 = vpack.c.b16 %v96, %v94
  %v127 = vpack.c.b16 %v97, %v95
  %v128 = vpack.c.b16 %v100, %v98
  %v129 = vpack.c.b16 %v101, %v99
  %v130 = vpack.c.b16 %v104, %v102
  %v131 = vpack.c.b16 %v105, %v103
  %v132 = vpack.c.b16 %v108, %v106
  %v133 = vpack.c.b16 %v109, %v107
  %v134 = vpack.c.b16 %v112, %v110
  %v135 = vpack.c.b16 %v113, %v111
  %v136 = vpack.c.b16 %v116, %v114
  %v137 = vpack.c.b16 %v117, %v115
  %v138 = vpack.c.b16 %v120, %v118
  %v139 = vpack.c.b16 %v121, %v119
  %vm158 = vcmask 130048
  %v160 = vsel %vm158, %v66, 0
  %162 = vmatprep.subr.bf16.mxu0 %v123
  %163 = vmatpush1.bf16.msra.mxu0 %v122
  %164 = vmatprep.subr.bf16.mxu0 %v125
  %165 = vmatpush1.bf16.msra.mxu0 %v124
  %166 = vmatprep.subr.bf16.mxu0 %v127
  %167 = vmatpush1.bf16.msra.mxu0 %v126
  %168 = vmatprep.subr.bf16.mxu0 %v129
  %169 = vmatpush1.bf16.msra.mxu0 %v128
  %170 = vmatprep.subr.bf16.mxu0 %v131
  %171 = vmatpush1.bf16.msra.mxu0 %v130
  %172 = vmatprep.subr.bf16.mxu0 %v133
  %173 = vmatpush1.bf16.msra.mxu0 %v132
  %174 = vmatprep.subr.bf16.mxu0 %v135
  %175 = vmatpush1.bf16.msra.mxu0 %v134
  %176 = vmatprep.subr.bf16.mxu0 %v137
  %177 = vmatpush1.bf16.msra.mxu0 %v136
  %178 = vmatprep.subr.bf16.mxu0 %v139
  %179 = vmatpush1.bf16.msra.mxu0 %v138
  %180 = vmatprep.subr.bf16.mxu0 0
  %181 = vmatpush1.bf16.msra.mxu0 0
  %182 = vmatprep.subr.bf16.mxu0 0
  %183 = vmatpush1.bf16.msra.mxu0 0
  %184 = vmatprep.subr.bf16.mxu0 0
  %185 = vmatpush1.bf16.msra.mxu0 0
  %186 = vmatprep.subr.bf16.mxu0 0
  %187 = vmatpush1.bf16.msra.mxu0 0
  %188 = vmatprep.subr.bf16.mxu0 0
  %189 = vmatpush1.bf16.msra.mxu0 0
  %190 = vmatprep.subr.bf16.mxu0 0
  %191 = vmatpush1.bf16.msra.mxu0 0
  %192 = vmatprep.subr.bf16.mxu0 0
  %193 = vmatpush1.bf16.msra.mxu0 0
  %194 = vmatprep.mubr.bf16.mxu0 %v160
  %195 = vmatmul.mubr.bf16.gmra.mrb[0].mxu0 %v65
  %v196 = vpop.f32.mrb[0].mxu0
  %v197 = vadd.f32 %v52, %v196
  %v198 = vpop.f32.mrb[0].mxu0
  %v199 = vadd.f32 %v52, %v198
  %v200 = vpop.f32.mrb[0].mxu0
  %v201 = vadd.f32 %v57, %v200
  %v202 = vpop.f32.mrb[0].mxu0
  %v203 = vadd.f32 %v57, %v202
  %204 = vdwg.mxu0
  %v205 = vmax.f32 %v197, 0.0
  %v206 = vmax.f32 %v199, 0.0
  %v207 = vmax.f32 %v201, 0.0
  %v208 = vmax.f32 %v203, 0.0
  %s209 = scalar_lea.vmem %s2, 16
  %v210 = vld [vmem:[%s209] sm:$0xff]
  %v211 = vld [vmem:[%s209 + $0x8] sm:$0xff]
  %s212 = scalar_lea.vmem %s3, 16
  %v213 = vld [vmem:[%s212] sm:$0xff]
  %v214 = vld [vmem:[%s212 + $0x8] sm:$0xff]
  %v215 = vpack.c.bf16 %v207, %v205
  %v216 = vpack.c.bf16 %v208, %v206
  %v217 = vld [vmem:[%s4] sm:$0xf]
  %v218 = vld [vmem:[%s4 + $0x4] sm:$0xf]
  %v219 = vld [vmem:[%s4 + $0x8] sm:$0xf]
  %v220 = vld [vmem:[%s4 + $0xc] sm:$0xf]
  %v221 = vld [vmem:[%s4 + $0x10] sm:$0xf]
  %v222 = vld [vmem:[%s4 + $0x14] sm:$0xf]
  %v223 = vld [vmem:[%s4 + $0x18] sm:$0xf]
  %v224 = vld [vmem:[%s4 + $0x1c] sm:$0xf]
  %v225 = vld [vmem:[%s4 + $0x20] sm:$0xf]
  %v226 = vld [vmem:[%s4 + $0x24] sm:$0xf]
  %v227 = vld [vmem:[%s4 + $0x28] sm:$0xf]
  %v228 = vld [vmem:[%s4 + $0x2c] sm:$0xf]
  %v229 = vld [vmem:[%s4 + $0x30] sm:$0xf]
  %v230 = vld [vmem:[%s4 + $0x34] sm:$0xf]
  %v231 = vld [vmem:[%s4 + $0x38] sm:$0xf]
  %v232 = vld [vmem:[%s4 + $0x3c] sm:$0xf]
  %v233 = vld [vmem:[%s4 + $0x40] sm:$0xf]
  %v234 = vld [vmem:[%s4 + $0x44] sm:$0xf]
  %v235 = vld [vmem:[%s4 + $0x48] sm:$0xf]
  %v236 = vld [vmem:[%s4 + $0x4c] sm:$0xf]
  %v237 = vld [vmem:[%s4 + $0x50] sm:$0xf]
  %v238 = vld [vmem:[%s4 + $0x54] sm:$0xf]
  %v239 = vld [vmem:[%s4 + $0x58] sm:$0xf]
  %v240 = vld [vmem:[%s4 + $0x5c] sm:$0xf]
  %v241 = vld [vmem:[%s4 + $0x60] sm:$0x3]
  %v267 = vunpack.c.l.b16 %v217
  %v268 = vunpack.c.l.b16 %v218
  %v269 = vunpack.c.l.b16 %v219
  %v270 = vunpack.c.l.b16 %v220
  %v271 = vunpack.c.l.b16 %v221
  %v272 = vunpack.c.l.b16 %v222
  %v273 = vunpack.c.l.b16 %v223
  %v274 = vunpack.c.l.b16 %v224
  %v275 = vunpack.c.l.b16 %v225
  %v276 = vunpack.c.l.b16 %v226
  %v277 = vunpack.c.l.b16 %v227
  %v278 = vunpack.c.l.b16 %v228
  %v279 = vunpack.c.l.b16 %v229
  %v280 = vunpack.c.l.b16 %v230
  %v281 = vunpack.c.l.b16 %v231
  %v282 = vunpack.c.l.b16 %v232
  %v283 = vunpack.c.l.b16 %v233
  %v284 = vunpack.c.l.b16 %v234
  %v285 = vunpack.c.l.b16 %v235
  %v286 = vunpack.c.l.b16 %v236
  %v287 = vunpack.c.l.b16 %v237
  %v288 = vunpack.c.l.b16 %v238
  %v289 = vunpack.c.l.b16 %v239
  %v290 = vunpack.c.l.b16 %v240
  %v291 = vunpack.c.l.b16 %v241
  %v292 = vpack.c.b16 %v268, %v267
  %v293 = vpack.c.b16 %v270, %v269
  %v294 = vpack.c.b16 %v272, %v271
  %v295 = vpack.c.b16 %v274, %v273
  %v296 = vpack.c.b16 %v276, %v275
  %v297 = vpack.c.b16 %v278, %v277
  %v298 = vpack.c.b16 %v280, %v279
  %v299 = vpack.c.b16 %v282, %v281
  %v300 = vpack.c.b16 %v284, %v283
  %v301 = vpack.c.b16 %v286, %v285
  %v302 = vpack.c.b16 %v288, %v287
  %v303 = vpack.c.b16 %v290, %v289
  %v304 = vpack.c.b16 %v291, %v291
  %vm317 = vcmask 556032
  %v319 = vsel %vm317, %v216, 0
  %vm321 = vcmask 1041408
  %v323 = vsel %vm321, %v304, 0
  %325 = vmatprep.subr.bf16.mxu0 0
  %326 = vmatpush1.bf16.msra.mxu0 %v292
  %327 = vmatprep.subr.bf16.mxu0 0
  %328 = vmatpush1.bf16.msra.mxu0 %v293
  %329 = vmatprep.subr.bf16.mxu0 0
  %330 = vmatpush1.bf16.msra.mxu0 %v294
  %331 = vmatprep.subr.bf16.mxu0 0
  %332 = vmatpush1.bf16.msra.mxu0 %v295
  %333 = vmatprep.subr.bf16.mxu0 0
  %334 = vmatpush1.bf16.msra.mxu0 %v296
  %335 = vmatprep.subr.bf16.mxu0 0
  %336 = vmatpush1.bf16.msra.mxu0 %v297
  %337 = vmatprep.subr.bf16.mxu0 0
  %338 = vmatpush1.bf16.msra.mxu0 %v298
  %339 = vmatprep.subr.bf16.mxu0 0
  %340 = vmatpush1.bf16.msra.mxu0 %v299
  %341 = vmatprep.subr.bf16.mxu0 0
  %342 = vmatpush1.bf16.msra.mxu0 %v300
  %343 = vmatprep.subr.bf16.mxu0 0
  %344 = vmatpush1.bf16.msra.mxu0 %v301
  %345 = vmatprep.subr.bf16.mxu0 0
  %346 = vmatpush1.bf16.msra.mxu0 %v302
  %347 = vmatprep.subr.bf16.mxu0 0
  %348 = vmatpush1.bf16.msra.mxu0 %v303
  %349 = vmatprep.subr.bf16.mxu0 0
  %350 = vmatpush1.bf16.msra.mxu0 %v323
  %351 = vmatprep.subr.bf16.mxu0 0
  %352 = vmatpush1.bf16.msra.mxu0 0
  %353 = vmatprep.subr.bf16.mxu0 0
  %354 = vmatpush1.bf16.msra.mxu0 0
  %355 = vmatprep.subr.bf16.mxu0 0
  %356 = vmatpush1.bf16.msra.mxu0 0
  %357 = vmatprep.mubr.bf16.mxu0 %v319
  %358 = vmatmul.mubr.bf16.gmra.mrb[0].mxu0 %v215
  %v359 = vpop.f32.mrb[0].mxu0
  %v360 = vadd.f32 0.0, %v359
  %v361 = vpop.f32.mrb[0].mxu0
  %v362 = vpop.f32.mrb[0].mxu0
  %v363 = vadd.f32 0.0, %v362
  %v364 = vpop.f32.mrb[0].mxu0
  %365 = vdwg.mxu0
  %v366 = vpack.c.bf16 %v363, %v360
  %vm367 = vcmask 400384
  %368 = vst.msk [vmem:[#allocation2] sm:$0xff] %vm367, %v366
  %s369 = scalar_lea.vmem %s4, 100
  %v370 = vld [vmem:[%s369] sm:$0xf]
  %v371 = vld [vmem:[%s369 + $0x4] sm:$0xf]
  %v372 = vld [vmem:[%s369 + $0x8] sm:$0xf]
  %v373 = vld [vmem:[%s369 + $0xc] sm:$0xf]
  %v374 = vld [vmem:[%s369 + $0x10] sm:$0xf]
  %v375 = vld [vmem:[%s369 + $0x14] sm:$0xf]
  %v376 = vld [vmem:[%s369 + $0x18] sm:$0xf]
  %v377 = vld [vmem:[%s369 + $0x1c] sm:$0xf]
  %v378 = vld [vmem:[%s369 + $0x20] sm:$0xf]
  %v379 = vld [vmem:[%s369 + $0x24] sm:$0xf]
  %v380 = vld [vmem:[%s369 + $0x28] sm:$0xf]
  %v381 = vld [vmem:[%s369 + $0x2c] sm:$0xf]
  %v382 = vld [vmem:[%s369 + $0x30] sm:$0xf]
  %v383 = vld [vmem:[%s369 + $0x34] sm:$0xf]
  %v384 = vld [vmem:[%s369 + $0x38] sm:$0xf]
  %v385 = vld [vmem:[%s369 + $0x3c] sm:$0xf]
  %v386 = vld [vmem:[%s369 + $0x40] sm:$0xf]
  %v387 = vld [vmem:[%s369 + $0x44] sm:$0xf]
  %v388 = vld [vmem:[%s369 + $0x48] sm:$0xf]
  %v389 = vld [vmem:[%s369 + $0x4c] sm:$0xf]
  %v390 = vld [vmem:[%s369 + $0x50] sm:$0xf]
  %v391 = vld [vmem:[%s369 + $0x54] sm:$0xf]
  %v392 = vld [vmem:[%s369 + $0x58] sm:$0xf]
  %v393 = vld [vmem:[%s369 + $0x5c] sm:$0xf]
  %v394 = vld [vmem:[%s369 + $0x60] sm:$0x3]
  %v420 = vunpack.c.l.b16 %v370
  %v421 = vunpack.c.l.b16 %v371
  %v422 = vunpack.c.l.b16 %v372
  %v423 = vunpack.c.l.b16 %v373
  %v424 = vunpack.c.l.b16 %v374
  %v425 = vunpack.c.l.b16 %v375
  %v426 = vunpack.c.l.b16 %v376
  %v427 = vunpack.c.l.b16 %v377
  %v428 = vunpack.c.l.b16 %v378
  %v429 = vunpack.c.l.b16 %v379
  %v430 = vunpack.c.l.b16 %v380
  %v431 = vunpack.c.l.b16 %v381
  %v432 = vunpack.c.l.b16 %v382
  %v433 = vunpack.c.l.b16 %v383
  %v434 = vunpack.c.l.b16 %v384
  %v435 = vunpack.c.l.b16 %v385
  %v436 = vunpack.c.l.b16 %v386
  %v437 = vunpack.c.l.b16 %v387
  %v438 = vunpack.c.l.b16 %v388
  %v439 = vunpack.c.l.b16 %v389
  %v440 = vunpack.c.l.b16 %v390
  %v441 = vunpack.c.l.b16 %v391
  %v442 = vunpack.c.l.b16 %v392
  %v443 = vunpack.c.l.b16 %v393
  %v444 = vunpack.c.l.b16 %v394
  %v445 = vpack.c.b16 %v421, %v420
  %v446 = vpack.c.b16 %v423, %v422
  %v447 = vpack.c.b16 %v425, %v424
  %v448 = vpack.c.b16 %v427, %v426
  %v449 = vpack.c.b16 %v429, %v428
  %v450 = vpack.c.b16 %v431, %v430
  %v451 = vpack.c.b16 %v433, %v432
  %v452 = vpack.c.b16 %v435, %v434
  %v453 = vpack.c.b16 %v437, %v436
  %v454 = vpack.c.b16 %v439, %v438
  %v455 = vpack.c.b16 %v441, %v440
  %v456 = vpack.c.b16 %v443, %v442
  %v457 = vpack.c.b16 %v444, %v444
  %v471 = vsel %vm321, %v457, 0
  %473 = vmatprep.subr.bf16.mxu0 0
  %474 = vmatpush1.bf16.msra.mxu0 %v445
  %475 = vmatprep.subr.bf16.mxu0 0
  %476 = vmatpush1.bf16.msra.mxu0 %v446
  %477 = vmatprep.subr.bf16.mxu0 0
  %478 = vmatpush1.bf16.msra.mxu0 %v447
  %479 = vmatprep.subr.bf16.mxu0 0
  %480 = vmatpush1.bf16.msra.mxu0 %v448
  %481 = vmatprep.subr.bf16.mxu0 0
  %482 = vmatpush1.bf16.msra.mxu0 %v449
  %483 = vmatprep.subr.bf16.mxu0 0
  %484 = vmatpush1.bf16.msra.mxu0 %v450
  %485 = vmatprep.subr.bf16.mxu0 0
  %486 = vmatpush1.bf16.msra.mxu0 %v451
  %487 = vmatprep.subr.bf16.mxu0 0
  %488 = vmatpush1.bf16.msra.mxu0 %v452
  %489 = vmatprep.subr.bf16.mxu0 0
  %490 = vmatpush1.bf16.msra.mxu0 %v453
  %491 = vmatprep.subr.bf16.mxu0 0
  %492 = vmatpush1.bf16.msra.mxu0 %v454
  %493 = vmatprep.subr.bf16.mxu0 0
  %494 = vmatpush1.bf16.msra.mxu0 %v455
  %495 = vmatprep.subr.bf16.mxu0 0
  %496 = vmatpush1.bf16.msra.mxu0 %v456
  %497 = vmatprep.subr.bf16.mxu0 0
  %498 = vmatpush1.bf16.msra.mxu0 %v471
  %499 = vmatprep.subr.bf16.mxu0 0
  %500 = vmatpush1.bf16.msra.mxu0 0
  %501 = vmatprep.subr.bf16.mxu0 0
  %502 = vmatpush1.bf16.msra.mxu0 0
  %503 = vmatprep.subr.bf16.mxu0 0
  %504 = vmatpush1.bf16.msra.mxu0 0
  %505 = vmatprep.mubr.bf16.mxu0 %v319
  %506 = vmatmul.mubr.bf16.gmra.mrb[0].mxu0 %v215
  %v507 = vpop.f32.mrb[0].mxu0
  %v508 = vadd.f32 0.0, %v507
  %v509 = vpop.f32.mrb[0].mxu0
  %v510 = vpop.f32.mrb[0].mxu0
  %v511 = vadd.f32 0.0, %v510
  %v512 = vpop.f32.mrb[0].mxu0
  %513 = vdwg.mxu0
  %v514 = vpack.c.bf16 %v511, %v508
  %515 = vst.msk [vmem:[#allocation2 + $0x8] sm:$0xff] %vm367, %v514
  %s516 = scalar_lea.vmem %s4, 200
  %v517 = vld [vmem:[%s516] sm:$0xf]
  %v518 = vld [vmem:[%s516 + $0x4] sm:$0xf]
  %v519 = vld [vmem:[%s516 + $0x8] sm:$0xf]
  %v520 = vld [vmem:[%s516 + $0xc] sm:$0xf]
  %v521 = vld [vmem:[%s516 + $0x10] sm:$0xf]
  %v522 = vld [vmem:[%s516 + $0x14] sm:$0xf]
  %v523 = vld [vmem:[%s516 + $0x18] sm:$0xf]
  %v524 = vld [vmem:[%s516 + $0x1c] sm:$0xf]
  %v525 = vld [vmem:[%s516 + $0x20] sm:$0xf]
  %v526 = vld [vmem:[%s516 + $0x24] sm:$0xf]
  %v527 = vld [vmem:[%s516 + $0x28] sm:$0xf]
  %v528 = vld [vmem:[%s516 + $0x2c] sm:$0xf]
  %v529 = vld [vmem:[%s516 + $0x30] sm:$0xf]
  %v530 = vld [vmem:[%s516 + $0x34] sm:$0xf]
  %v531 = vld [vmem:[%s516 + $0x38] sm:$0xf]
  %v532 = vld [vmem:[%s516 + $0x3c] sm:$0xf]
  %v533 = vld [vmem:[%s516 + $0x40] sm:$0xf]
  %v534 = vld [vmem:[%s516 + $0x44] sm:$0xf]
  %v535 = vld [vmem:[%s516 + $0x48] sm:$0xf]
  %v536 = vld [vmem:[%s516 + $0x4c] sm:$0xf]
  %v537 = vld [vmem:[%s516 + $0x50] sm:$0xf]
  %v538 = vld [vmem:[%s516 + $0x54] sm:$0xf]
  %v539 = vld [vmem:[%s516 + $0x58] sm:$0xf]
  %v540 = vld [vmem:[%s516 + $0x5c] sm:$0xf]
  %v541 = vld [vmem:[%s516 + $0x60] sm:$0x3]
  %v567 = vunpack.c.l.b16 %v517
  %v568 = vunpack.c.l.b16 %v518
  %v569 = vunpack.c.l.b16 %v519
  %v570 = vunpack.c.l.b16 %v520
  %v571 = vunpack.c.l.b16 %v521
  %v572 = vunpack.c.l.b16 %v522
  %v573 = vunpack.c.l.b16 %v523
  %v574 = vunpack.c.l.b16 %v524
  %v575 = vunpack.c.l.b16 %v525
  %v576 = vunpack.c.l.b16 %v526
  %v577 = vunpack.c.l.b16 %v527
  %v578 = vunpack.c.l.b16 %v528
  %v579 = vunpack.c.l.b16 %v529
  %v580 = vunpack.c.l.b16 %v530
  %v581 = vunpack.c.l.b16 %v531
  %v582 = vunpack.c.l.b16 %v532
  %v583 = vunpack.c.l.b16 %v533
  %v584 = vunpack.c.l.b16 %v534
  %v585 = vunpack.c.l.b16 %v535
  %v586 = vunpack.c.l.b16 %v536
  %v587 = vunpack.c.l.b16 %v537
  %v588 = vunpack.c.l.b16 %v538
  %v589 = vunpack.c.l.b16 %v539
  %v590 = vunpack.c.l.b16 %v540
  %v591 = vunpack.c.l.b16 %v541
  %v592 = vpack.c.b16 %v568, %v567
  %v593 = vpack.c.b16 %v570, %v569
  %v594 = vpack.c.b16 %v572, %v571
  %v595 = vpack.c.b16 %v574, %v573
  %v596 = vpack.c.b16 %v576, %v575
  %v597 = vpack.c.b16 %v578, %v577
  %v598 = vpack.c.b16 %v580, %v579
  %v599 = vpack.c.b16 %v582, %v581
  %v600 = vpack.c.b16 %v584, %v583
  %v601 = vpack.c.b16 %v586, %v585
  %v602 = vpack.c.b16 %v588, %v587
  %v603 = vpack.c.b16 %v590, %v589
  %v604 = vpack.c.b16 %v591, %v591
  %v618 = vsel %vm321, %v604, 0
  %620 = vmatprep.subr.bf16.mxu0 0
  %621 = vmatpush1.bf16.msra.mxu0 %v592
  %622 = vmatprep.subr.bf16.mxu0 0
  %623 = vmatpush1.bf16.msra.mxu0 %v593
  %624 = vmatprep.subr.bf16.mxu0 0
  %625 = vmatpush1.bf16.msra.mxu0 %v594
  %626 = vmatprep.subr.bf16.mxu0 0
  %627 = vmatpush1.bf16.msra.mxu0 %v595
  %628 = vmatprep.subr.bf16.mxu0 0
  %629 = vmatpush1.bf16.msra.mxu0 %v596
  %630 = vmatprep.subr.bf16.mxu0 0
  %631 = vmatpush1.bf16.msra.mxu0 %v597
  %632 = vmatprep.subr.bf16.mxu0 0
  %633 = vmatpush1.bf16.msra.mxu0 %v598
  %634 = vmatprep.subr.bf16.mxu0 0
  %635 = vmatpush1.bf16.msra.mxu0 %v599
  %636 = vmatprep.subr.bf16.mxu0 0
  %637 = vmatpush1.bf16.msra.mxu0 %v600
  %638 = vmatprep.subr.bf16.mxu0 0
  %639 = vmatpush1.bf16.msra.mxu0 %v601
  %640 = vmatprep.subr.bf16.mxu0 0
  %641 = vmatpush1.bf16.msra.mxu0 %v602
  %642 = vmatprep.subr.bf16.mxu0 0
  %643 = vmatpush1.bf16.msra.mxu0 %v603
  %644 = vmatprep.subr.bf16.mxu0 0
  %645 = vmatpush1.bf16.msra.mxu0 %v618
  %646 = vmatprep.subr.bf16.mxu0 0
  %647 = vmatpush1.bf16.msra.mxu0 0
  %648 = vmatprep.subr.bf16.mxu0 0
  %649 = vmatpush1.bf16.msra.mxu0 0
  %650 = vmatprep.subr.bf16.mxu0 0
  %651 = vmatpush1.bf16.msra.mxu0 0
  %652 = vmatprep.mubr.bf16.mxu0 %v319
  %653 = vmatmul.mubr.bf16.gmra.mrb[0].mxu0 %v215
  %v654 = vpop.f32.mrb[0].mxu0
  %v655 = vadd.f32 0.0, %v654
  %v656 = vpop.f32.mrb[0].mxu0
  %v657 = vpop.f32.mrb[0].mxu0
  %v658 = vadd.f32 0.0, %v657
  %v659 = vpop.f32.mrb[0].mxu0
  %660 = vdwg.mxu0
  %v661 = vpack.c.bf16 %v658, %v655
  %662 = vst.msk [vmem:[#allocation2 + $0x10] sm:$0xff] %vm367, %v661
  %s663 = scalar_lea.vmem %s4, 300
  %v664 = vld [vmem:[%s663] sm:$0xf]
  %v665 = vld [vmem:[%s663 + $0x4] sm:$0xf]
  %v666 = vld [vmem:[%s663 + $0x8] sm:$0xf]
  %v667 = vld [vmem:[%s663 + $0xc] sm:$0xf]
  %v668 = vld [vmem:[%s663 + $0x10] sm:$0xf]
  %v669 = vld [vmem:[%s663 + $0x14] sm:$0xf]
  %v670 = vld [vmem:[%s663 + $0x18] sm:$0xf]
  %v671 = vld [vmem:[%s663 + $0x1c] sm:$0xf]
  %v672 = vld [vmem:[%s663 + $0x20] sm:$0xf]
  %v673 = vld [vmem:[%s663 + $0x24] sm:$0xf]
  %v674 = vld [vmem:[%s663 + $0x28] sm:$0xf]
  %v675 = vld [vmem:[%s663 + $0x2c] sm:$0xf]
  %v676 = vld [vmem:[%s663 + $0x30] sm:$0xf]
  %v677 = vld [vmem:[%s663 + $0x34] sm:$0xf]
  %v678 = vld [vmem:[%s663 + $0x38] sm:$0xf]
  %v679 = vld [vmem:[%s663 + $0x3c] sm:$0xf]
  %v680 = vld [vmem:[%s663 + $0x40] sm:$0xf]
  %v681 = vld [vmem:[%s663 + $0x44] sm:$0xf]
  %v682 = vld [vmem:[%s663 + $0x48] sm:$0xf]
  %v683 = vld [vmem:[%s663 + $0x4c] sm:$0xf]
  %v684 = vld [vmem:[%s663 + $0x50] sm:$0xf]
  %v685 = vld [vmem:[%s663 + $0x54] sm:$0xf]
  %v686 = vld [vmem:[%s663 + $0x58] sm:$0xf]
  %v687 = vld [vmem:[%s663 + $0x5c] sm:$0xf]
  %v688 = vld [vmem:[%s663 + $0x60] sm:$0x3]
  %v714 = vunpack.c.l.b16 %v664
  %v715 = vunpack.c.l.b16 %v665
  %v716 = vunpack.c.l.b16 %v666
  %v717 = vunpack.c.l.b16 %v667
  %v718 = vunpack.c.l.b16 %v668
  %v719 = vunpack.c.l.b16 %v669
  %v720 = vunpack.c.l.b16 %v670
  %v721 = vunpack.c.l.b16 %v671
  %v722 = vunpack.c.l.b16 %v672
  %v723 = vunpack.c.l.b16 %v673
  %v724 = vunpack.c.l.b16 %v674
  %v725 = vunpack.c.l.b16 %v675
  %v726 = vunpack.c.l.b16 %v676
  %v727 = vunpack.c.l.b16 %v677
  %v728 = vunpack.c.l.b16 %v678
  %v729 = vunpack.c.l.b16 %v679
  %v730 = vunpack.c.l.b16 %v680
  %v731 = vunpack.c.l.b16 %v681
  %v732 = vunpack.c.l.b16 %v682
  %v733 = vunpack.c.l.b16 %v683
  %v734 = vunpack.c.l.b16 %v684
  %v735 = vunpack.c.l.b16 %v685
  %v736 = vunpack.c.l.b16 %v686
  %v737 = vunpack.c.l.b16 %v687
  %v738 = vunpack.c.l.b16 %v688
  %v739 = vpack.c.b16 %v715, %v714
  %v740 = vpack.c.b16 %v717, %v716
  %v741 = vpack.c.b16 %v719, %v718
  %v742 = vpack.c.b16 %v721, %v720
  %v743 = vpack.c.b16 %v723, %v722
  %v744 = vpack.c.b16 %v725, %v724
  %v745 = vpack.c.b16 %v727, %v726
  %v746 = vpack.c.b16 %v729, %v728
  %v747 = vpack.c.b16 %v731, %v730
  %v748 = vpack.c.b16 %v733, %v732
  %v749 = vpack.c.b16 %v735, %v734
  %v750 = vpack.c.b16 %v737, %v736
  %v751 = vpack.c.b16 %v738, %v738
  %v765 = vsel %vm321, %v751, 0
  %767 = vmatprep.subr.bf16.mxu0 0
  %768 = vmatpush1.bf16.msra.mxu0 %v739
  %769 = vmatprep.subr.bf16.mxu0 0
  %770 = vmatpush1.bf16.msra.mxu0 %v740
  %771 = vmatprep.subr.bf16.mxu0 0
  %772 = vmatpush1.bf16.msra.mxu0 %v741
  %773 = vmatprep.subr.bf16.mxu0 0
  %774 = vmatpush1.bf16.msra.mxu0 %v742
  %775 = vmatprep.subr.bf16.mxu0 0
  %776 = vmatpush1.bf16.msra.mxu0 %v743
  %777 = vmatprep.subr.bf16.mxu0 0
  %778 = vmatpush1.bf16.msra.mxu0 %v744
  %779 = vmatprep.subr.bf16.mxu0 0
  %780 = vmatpush1.bf16.msra.mxu0 %v745
  %781 = vmatprep.subr.bf16.mxu0 0
  %782 = vmatpush1.bf16.msra.mxu0 %v746
  %783 = vmatprep.subr.bf16.mxu0 0
  %784 = vmatpush1.bf16.msra.mxu0 %v747
  %785 = vmatprep.subr.bf16.mxu0 0
  %786 = vmatpush1.bf16.msra.mxu0 %v748
  %787 = vmatprep.subr.bf16.mxu0 0
  %788 = vmatpush1.bf16.msra.mxu0 %v749
  %789 = vmatprep.subr.bf16.mxu0 0
  %790 = vmatpush1.bf16.msra.mxu0 %v750
  %791 = vmatprep.subr.bf16.mxu0 0
  %792 = vmatpush1.bf16.msra.mxu0 %v765
  %793 = vmatprep.subr.bf16.mxu0 0
  %794 = vmatpush1.bf16.msra.mxu0 0
  %795 = vmatprep.subr.bf16.mxu0 0
  %796 = vmatpush1.bf16.msra.mxu0 0
  %797 = vmatprep.subr.bf16.mxu0 0
  %798 = vmatpush1.bf16.msra.mxu0 0
  %799 = vmatprep.mubr.bf16.mxu0 %v319
  %800 = vmatmul.mubr.bf16.gmra.mrb[0].mxu0 %v215
  %v801 = vpop.f32.mrb[0].mxu0
  %v802 = vadd.f32 0.0, %v801
  %v803 = vpop.f32.mrb[0].mxu0
  %v804 = vpop.f32.mrb[0].mxu0
  %v805 = vadd.f32 0.0, %v804
  %v806 = vpop.f32.mrb[0].mxu0
  %807 = vdwg.mxu0
  %v808 = vpack.c.bf16 %v805, %v802
  %809 = vst.msk [vmem:[#allocation2 + $0x18] sm:$0xff] %vm367, %v808
  %s810 = scalar_lea.vmem %s4, 400
  %v811 = vld [vmem:[%s810] sm:$0xf]
  %v812 = vld [vmem:[%s810 + $0x4] sm:$0xf]
  %v813 = vld [vmem:[%s810 + $0x8] sm:$0xf]
  %v814 = vld [vmem:[%s810 + $0xc] sm:$0xf]
  %v815 = vld [vmem:[%s810 + $0x10] sm:$0xf]
  %v816 = vld [vmem:[%s810 + $0x14] sm:$0xf]
  %v817 = vld [vmem:[%s810 + $0x18] sm:$0xf]
  %v818 = vld [vmem:[%s810 + $0x1c] sm:$0xf]
  %v819 = vld [vmem:[%s810 + $0x20] sm:$0xf]
  %v820 = vld [vmem:[%s810 + $0x24] sm:$0xf]
  %v821 = vld [vmem:[%s810 + $0x28] sm:$0xf]
  %v822 = vld [vmem:[%s810 + $0x2c] sm:$0xf]
  %v823 = vld [vmem:[%s810 + $0x30] sm:$0xf]
  %v824 = vld [vmem:[%s810 + $0x34] sm:$0xf]
  %v825 = vld [vmem:[%s810 + $0x38] sm:$0xf]
  %v826 = vld [vmem:[%s810 + $0x3c] sm:$0xf]
  %v827 = vld [vmem:[%s810 + $0x40] sm:$0xf]
  %v828 = vld [vmem:[%s810 + $0x44] sm:$0xf]
  %v829 = vld [vmem:[%s810 + $0x48] sm:$0xf]
  %v830 = vld [vmem:[%s810 + $0x4c] sm:$0xf]
  %v831 = vld [vmem:[%s810 + $0x50] sm:$0xf]
  %v832 = vld [vmem:[%s810 + $0x54] sm:$0xf]
  %v833 = vld [vmem:[%s810 + $0x58] sm:$0xf]
  %v834 = vld [vmem:[%s810 + $0x5c] sm:$0xf]
  %v835 = vld [vmem:[%s810 + $0x60] sm:$0x3]
  %v861 = vunpack.c.l.b16 %v811
  %v862 = vunpack.c.l.b16 %v812
  %v863 = vunpack.c.l.b16 %v813
  %v864 = vunpack.c.l.b16 %v814
  %v865 = vunpack.c.l.b16 %v815
  %v866 = vunpack.c.l.b16 %v816
  %v867 = vunpack.c.l.b16 %v817
  %v868 = vunpack.c.l.b16 %v818
  %v869 = vunpack.c.l.b16 %v819
  %v870 = vunpack.c.l.b16 %v820
  %v871 = vunpack.c.l.b16 %v821
  %v872 = vunpack.c.l.b16 %v822
  %v873 = vunpack.c.l.b16 %v823
  %v874 = vunpack.c.l.b16 %v824
  %v875 = vunpack.c.l.b16 %v825
  %v876 = vunpack.c.l.b16 %v826
  %v877 = vunpack.c.l.b16 %v827
  %v878 = vunpack.c.l.b16 %v828
  %v879 = vunpack.c.l.b16 %v829
  %v880 = vunpack.c.l.b16 %v830
  %v881 = vunpack.c.l.b16 %v831
  %v882 = vunpack.c.l.b16 %v832
  %v883 = vunpack.c.l.b16 %v833
  %v884 = vunpack.c.l.b16 %v834
  %v885 = vunpack.c.l.b16 %v835
  %v886 = vpack.c.b16 %v862, %v861
  %v887 = vpack.c.b16 %v864, %v863
  %v888 = vpack.c.b16 %v866, %v865
  %v889 = vpack.c.b16 %v868, %v867
  %v890 = vpack.c.b16 %v870, %v869
  %v891 = vpack.c.b16 %v872, %v871
  %v892 = vpack.c.b16 %v874, %v873
  %v893 = vpack.c.b16 %v876, %v875
  %v894 = vpack.c.b16 %v878, %v877
  %v895 = vpack.c.b16 %v880, %v879
  %v896 = vpack.c.b16 %v882, %v881
  %v897 = vpack.c.b16 %v884, %v883
  %v898 = vpack.c.b16 %v885, %v885
  %v912 = vsel %vm321, %v898, 0
  %914 = vmatprep.subr.bf16.mxu0 0
  %915 = vmatpush1.bf16.msra.mxu0 %v886
  %916 = vmatprep.subr.bf16.mxu0 0
  %917 = vmatpush1.bf16.msra.mxu0 %v887
  %918 = vmatprep.subr.bf16.mxu0 0
  %919 = vmatpush1.bf16.msra.mxu0 %v888
  %920 = vmatprep.subr.bf16.mxu0 0
  %921 = vmatpush1.bf16.msra.mxu0 %v889
  %922 = vmatprep.subr.bf16.mxu0 0
  %923 = vmatpush1.bf16.msra.mxu0 %v890
  %924 = vmatprep.subr.bf16.mxu0 0
  %925 = vmatpush1.bf16.msra.mxu0 %v891
  %926 = vmatprep.subr.bf16.mxu0 0
  %927 = vmatpush1.bf16.msra.mxu0 %v892
  %928 = vmatprep.subr.bf16.mxu0 0
  %929 = vmatpush1.bf16.msra.mxu0 %v893
  %930 = vmatprep.subr.bf16.mxu0 0
  %931 = vmatpush1.bf16.msra.mxu0 %v894
  %932 = vmatprep.subr.bf16.mxu0 0
  %933 = vmatpush1.bf16.msra.mxu0 %v895
  %934 = vmatprep.subr.bf16.mxu0 0
  %935 = vmatpush1.bf16.msra.mxu0 %v896
  %936 = vmatprep.subr.bf16.mxu0 0
  %937 = vmatpush1.bf16.msra.mxu0 %v897
  %938 = vmatprep.subr.bf16.mxu0 0
  %939 = vmatpush1.bf16.msra.mxu0 %v912
  %940 = vmatprep.subr.bf16.mxu0 0
  %941 = vmatpush1.bf16.msra.mxu0 0
  %942 = vmatprep.subr.bf16.mxu0 0
  %943 = vmatpush1.bf16.msra.mxu0 0
  %944 = vmatprep.subr.bf16.mxu0 0
  %945 = vmatpush1.bf16.msra.mxu0 0
  %946 = vmatprep.mubr.bf16.mxu0 %v319
  %947 = vmatmul.mubr.bf16.gmra.mrb[0].mxu0 %v215
  %v948 = vpop.f32.mrb[0].mxu0
  %v949 = vadd.f32 0.0, %v948
  %v950 = vpop.f32.mrb[0].mxu0
  %v951 = vpop.f32.mrb[0].mxu0
  %v952 = vadd.f32 0.0, %v951
  %v953 = vpop.f32.mrb[0].mxu0
  %954 = vdwg.mxu0
  %v955 = vpack.c.bf16 %v952, %v949
  %956 = vst.msk [vmem:[#allocation2 + $0x20] sm:$0xff] %vm367, %v955
  %s957 = scalar_lea.vmem %s4, 500
  %v958 = vld [vmem:[%s957] sm:$0xf]
  %v959 = vld [vmem:[%s957 + $0x4] sm:$0xf]
  %v960 = vld [vmem:[%s957 + $0x8] sm:$0xf]
  %v961 = vld [vmem:[%s957 + $0xc] sm:$0xf]
  %v962 = vld [vmem:[%s957 + $0x10] sm:$0xf]
  %v963 = vld [vmem:[%s957 + $0x14] sm:$0xf]
  %v964 = vld [vmem:[%s957 + $0x18] sm:$0xf]
  %v965 = vld [vmem:[%s957 + $0x1c] sm:$0xf]
  %v966 = vld [vmem:[%s957 + $0x20] sm:$0xf]
  %v967 = vld [vmem:[%s957 + $0x24] sm:$0xf]
  %v968 = vld [vmem:[%s957 + $0x28] sm:$0xf]
  %v969 = vld [vmem:[%s957 + $0x2c] sm:$0xf]
  %v970 = vld [vmem:[%s957 + $0x30] sm:$0xf]
  %v971 = vld [vmem:[%s957 + $0x34] sm:$0xf]
  %v972 = vld [vmem:[%s957 + $0x38] sm:$0xf]
  %v973 = vld [vmem:[%s957 + $0x3c] sm:$0xf]
  %v974 = vld [vmem:[%s957 + $0x40] sm:$0xf]
  %v975 = vld [vmem:[%s957 + $0x44] sm:$0xf]
  %v976 = vld [vmem:[%s957 + $0x48] sm:$0xf]
  %v977 = vld [vmem:[%s957 + $0x4c] sm:$0xf]
  %v978 = vld [vmem:[%s957 + $0x50] sm:$0xf]
  %v979 = vld [vmem:[%s957 + $0x54] sm:$0xf]
  %v980 = vld [vmem:[%s957 + $0x58] sm:$0xf]
  %v981 = vld [vmem:[%s957 + $0x5c] sm:$0xf]
  %v982 = vld [vmem:[%s957 + $0x60] sm:$0x3]
  %v1008 = vunpack.c.l.b16 %v958
  %v1009 = vunpack.c.l.b16 %v959
  %v1010 = vunpack.c.l.b16 %v960
  %v1011 = vunpack.c.l.b16 %v961
  %v1012 = vunpack.c.l.b16 %v962
  %v1013 = vunpack.c.l.b16 %v963
  %v1014 = vunpack.c.l.b16 %v964
  %v1015 = vunpack.c.l.b16 %v965
  %v1016 = vunpack.c.l.b16 %v966
  %v1017 = vunpack.c.l.b16 %v967
  %v1018 = vunpack.c.l.b16 %v968
  %v1019 = vunpack.c.l.b16 %v969
  %v1020 = vunpack.c.l.b16 %v970
  %v1021 = vunpack.c.l.b16 %v971
  %v1022 = vunpack.c.l.b16 %v972
  %v1023 = vunpack.c.l.b16 %v973
  %v1024 = vunpack.c.l.b16 %v974
  %v1025 = vunpack.c.l.b16 %v975
  %v1026 = vunpack.c.l.b16 %v976
  %v1027 = vunpack.c.l.b16 %v977
  %v1028 = vunpack.c.l.b16 %v978
  %v1029 = vunpack.c.l.b16 %v979
  %v1030 = vunpack.c.l.b16 %v980
  %v1031 = vunpack.c.l.b16 %v981
  %v1032 = vunpack.c.l.b16 %v982
  %v1033 = vpack.c.b16 %v1009, %v1008
  %v1034 = vpack.c.b16 %v1011, %v1010
  %v1035 = vpack.c.b16 %v1013, %v1012
  %v1036 = vpack.c.b16 %v1015, %v1014
  %v1037 = vpack.c.b16 %v1017, %v1016
  %v1038 = vpack.c.b16 %v1019, %v1018
  %v1039 = vpack.c.b16 %v1021, %v1020
  %v1040 = vpack.c.b16 %v1023, %v1022
  %v1041 = vpack.c.b16 %v1025, %v1024
  %v1042 = vpack.c.b16 %v1027, %v1026
  %v1043 = vpack.c.b16 %v1029, %v1028
  %v1044 = vpack.c.b16 %v1031, %v1030
  %v1045 = vpack.c.b16 %v1032, %v1032
  %v1059 = vsel %vm321, %v1045, 0
  %1061 = vmatprep.subr.bf16.mxu0 0
  %1062 = vmatpush1.bf16.msra.mxu0 %v1033
  %1063 = vmatprep.subr.bf16.mxu0 0
  %1064 = vmatpush1.bf16.msra.mxu0 %v1034
  %1065 = vmatprep.subr.bf16.mxu0 0
  %1066 = vmatpush1.bf16.msra.mxu0 %v1035
  %1067 = vmatprep.subr.bf16.mxu0 0
  %1068 = vmatpush1.bf16.msra.mxu0 %v1036
  %1069 = vmatprep.subr.bf16.mxu0 0
  %1070 = vmatpush1.bf16.msra.mxu0 %v1037
  %1071 = vmatprep.subr.bf16.mxu0 0
  %1072 = vmatpush1.bf16.msra.mxu0 %v1038
  %1073 = vmatprep.subr.bf16.mxu0 0
  %1074 = vmatpush1.bf16.msra.mxu0 %v1039
  %1075 = vmatprep.subr.bf16.mxu0 0
  %1076 = vmatpush1.bf16.msra.mxu0 %v1040
  %1077 = vmatprep.subr.bf16.mxu0 0
  %1078 = vmatpush1.bf16.msra.mxu0 %v1041
  %1079 = vmatprep.subr.bf16.mxu0 0
  %1080 = vmatpush1.bf16.msra.mxu0 %v1042
  %1081 = vmatprep.subr.bf16.mxu0 0
  %1082 = vmatpush1.bf16.msra.mxu0 %v1043
  %1083 = vmatprep.subr.bf16.mxu0 0
  %1084 = vmatpush1.bf16.msra.mxu0 %v1044
  %1085 = vmatprep.subr.bf16.mxu0 0
  %1086 = vmatpush1.bf16.msra.mxu0 %v1059
  %1087 = vmatprep.subr.bf16.mxu0 0
  %1088 = vmatpush1.bf16.msra.mxu0 0
  %1089 = vmatprep.subr.bf16.mxu0 0
  %1090 = vmatpush1.bf16.msra.mxu0 0
  %1091 = vmatprep.subr.bf16.mxu0 0
  %1092 = vmatpush1.bf16.msra.mxu0 0
  %1093 = vmatprep.mubr.bf16.mxu0 %v319
  %1094 = vmatmul.mubr.bf16.gmra.mrb[0].mxu0 %v215
  %v1095 = vpop.f32.mrb[0].mxu0
  %v1096 = vadd.f32 0.0, %v1095
  %v1097 = vpop.f32.mrb[0].mxu0
  %v1098 = vpop.f32.mrb[0].mxu0
  %v1099 = vadd.f32 0.0, %v1098
  %v1100 = vpop.f32.mrb[0].mxu0
  %1101 = vdwg.mxu0
  %v1102 = vpack.c.bf16 %v1099, %v1096
  %1103 = vst.msk [vmem:[#allocation2 + $0x28] sm:$0xff] %vm367, %v1102
  %s1104 = scalar_lea.vmem %s4, 600
  %v1105 = vld [vmem:[%s1104] sm:$0xf]
  %v1106 = vld [vmem:[%s1104 + $0x4] sm:$0xf]
  %v1107 = vld [vmem:[%s1104 + $0x8] sm:$0xf]
  %v1108 = vld [vmem:[%s1104 + $0xc] sm:$0xf]
  %v1109 = vld [vmem:[%s1104 + $0x10] sm:$0xf]
  %v1110 = vld [vmem:[%s1104 + $0x14] sm:$0xf]
  %v1111 = vld [vmem:[%s1104 + $0x18] sm:$0xf]
  %v1112 = vld [vmem:[%s1104 + $0x1c] sm:$0xf]
  %v1113 = vld [vmem:[%s1104 + $0x20] sm:$0xf]
  %v1114 = vld [vmem:[%s1104 + $0x24] sm:$0xf]
  %v1115 = vld [vmem:[%s1104 + $0x28] sm:$0xf]
  %v1116 = vld [vmem:[%s1104 + $0x2c] sm:$0xf]
  %v1117 = vld [vmem:[%s1104 + $0x30] sm:$0xf]
  %v1118 = vld [vmem:[%s1104 + $0x34] sm:$0xf]
  %v1119 = vld [vmem:[%s1104 + $0x38] sm:$0xf]
  %v1120 = vld [vmem:[%s1104 + $0x3c] sm:$0xf]
  %v1121 = vld [vmem:[%s1104 + $0x40] sm:$0xf]
  %v1122 = vld [vmem:[%s1104 + $0x44] sm:$0xf]
  %v1123 = vld [vmem:[%s1104 + $0x48] sm:$0xf]
  %v1124 = vld [vmem:[%s1104 + $0x4c] sm:$0xf]
  %v1125 = vld [vmem:[%s1104 + $0x50] sm:$0xf]
  %v1126 = vld [vmem:[%s1104 + $0x54] sm:$0xf]
  %v1127 = vld [vmem:[%s1104 + $0x58] sm:$0xf]
  %v1128 = vld [vmem:[%s1104 + $0x5c] sm:$0xf]
  %v1129 = vld [vmem:[%s1104 + $0x60] sm:$0x3]
  %v1155 = vunpack.c.l.b16 %v1105
  %v1156 = vunpack.c.l.b16 %v1106
  %v1157 = vunpack.c.l.b16 %v1107
  %v1158 = vunpack.c.l.b16 %v1108
  %v1159 = vunpack.c.l.b16 %v1109
  %v1160 = vunpack.c.l.b16 %v1110
  %v1161 = vunpack.c.l.b16 %v1111
  %v1162 = vunpack.c.l.b16 %v1112
  %v1163 = vunpack.c.l.b16 %v1113
  %v1164 = vunpack.c.l.b16 %v1114
  %v1165 = vunpack.c.l.b16 %v1115
  %v1166 = vunpack.c.l.b16 %v1116
  %v1167 = vunpack.c.l.b16 %v1117
  %v1168 = vunpack.c.l.b16 %v1118
  %v1169 = vunpack.c.l.b16 %v1119
  %v1170 = vunpack.c.l.b16 %v1120
  %v1171 = vunpack.c.l.b16 %v1121
  %v1172 = vunpack.c.l.b16 %v1122
  %v1173 = vunpack.c.l.b16 %v1123
  %v1174 = vunpack.c.l.b16 %v1124
  %v1175 = vunpack.c.l.b16 %v1125
  %v1176 = vunpack.c.l.b16 %v1126
  %v1177 = vunpack.c.l.b16 %v1127
  %v1178 = vunpack.c.l.b16 %v1128
  %v1179 = vunpack.c.l.b16 %v1129
  %v1180 = vpack.c.b16 %v1156, %v1155
  %v1181 = vpack.c.b16 %v1158, %v1157
  %v1182 = vpack.c.b16 %v1160, %v1159
  %v1183 = vpack.c.b16 %v1162, %v1161
  %v1184 = vpack.c.b16 %v1164, %v1163
  %v1185 = vpack.c.b16 %v1166, %v1165
  %v1186 = vpack.c.b16 %v1168, %v1167
  %v1187 = vpack.c.b16 %v1170, %v1169
  %v1188 = vpack.c.b16 %v1172, %v1171
  %v1189 = vpack.c.b16 %v1174, %v1173
  %v1190 = vpack.c.b16 %v1176, %v1175
  %v1191 = vpack.c.b16 %v1178, %v1177
  %v1192 = vpack.c.b16 %v1179, %v1179
  %v1206 = vsel %vm321, %v1192, 0
  %1208 = vmatprep.subr.bf16.mxu0 0
  %1209 = vmatpush1.bf16.msra.mxu0 %v1180
  %1210 = vmatprep.subr.bf16.mxu0 0
  %1211 = vmatpush1.bf16.msra.mxu0 %v1181
  %1212 = vmatprep.subr.bf16.mxu0 0
  %1213 = vmatpush1.bf16.msra.mxu0 %v1182
  %1214 = vmatprep.subr.bf16.mxu0 0
  %1215 = vmatpush1.bf16.msra.mxu0 %v1183
  %1216 = vmatprep.subr.bf16.mxu0 0
  %1217 = vmatpush1.bf16.msra.mxu0 %v1184
  %1218 = vmatprep.subr.bf16.mxu0 0
  %1219 = vmatpush1.bf16.msra.mxu0 %v1185
  %1220 = vmatprep.subr.bf16.mxu0 0
  %1221 = vmatpush1.bf16.msra.mxu0 %v1186
  %1222 = vmatprep.subr.bf16.mxu0 0
  %1223 = vmatpush1.bf16.msra.mxu0 %v1187
  %1224 = vmatprep.subr.bf16.mxu0 0
  %1225 = vmatpush1.bf16.msra.mxu0 %v1188
  %1226 = vmatprep.subr.bf16.mxu0 0
  %1227 = vmatpush1.bf16.msra.mxu0 %v1189
  %1228 = vmatprep.subr.bf16.mxu0 0
  %1229 = vmatpush1.bf16.msra.mxu0 %v1190
  %1230 = vmatprep.subr.bf16.mxu0 0
  %1231 = vmatpush1.bf16.msra.mxu0 %v1191
  %1232 = vmatprep.subr.bf16.mxu0 0
  %1233 = vmatpush1.bf16.msra.mxu0 %v1206
  %1234 = vmatprep.subr.bf16.mxu0 0
  %1235 = vmatpush1.bf16.msra.mxu0 0
  %1236 = vmatprep.subr.bf16.mxu0 0
  %1237 = vmatpush1.bf16.msra.mxu0 0
  %1238 = vmatprep.subr.bf16.mxu0 0
  %1239 = vmatpush1.bf16.msra.mxu0 0
  %1240 = vmatprep.mubr.bf16.mxu0 %v319
  %1241 = vmatmul.mubr.bf16.gmra.mrb[0].mxu0 %v215
  %v1242 = vpop.f32.mrb[0].mxu0
  %v1243 = vadd.f32 0.0, %v1242
  %v1244 = vpop.f32.mrb[0].mxu0
  %v1245 = vpop.f32.mrb[0].mxu0
  %v1246 = vadd.f32 0.0, %v1245
  %v1247 = vpop.f32.mrb[0].mxu0
  %1248 = vdwg.mxu0
  %v1249 = vpack.c.bf16 %v1246, %v1243
  %1250 = vst.msk [vmem:[#allocation2 + $0x30] sm:$0xff] %vm367, %v1249
  %s1251 = scalar_lea.vmem %s4, 700
  %v1252 = vld [vmem:[%s1251] sm:$0xf]
  %v1253 = vld [vmem:[%s1251 + $0x4] sm:$0xf]
  %v1254 = vld [vmem:[%s1251 + $0x8] sm:$0xf]
  %v1255 = vld [vmem:[%s1251 + $0xc] sm:$0xf]
  %v1256 = vld [vmem:[%s1251 + $0x10] sm:$0xf]
  %v1257 = vld [vmem:[%s1251 + $0x14] sm:$0xf]
  %v1258 = vld [vmem:[%s1251 + $0x18] sm:$0xf]
  %v1259 = vld [vmem:[%s1251 + $0x1c] sm:$0xf]
  %v1260 = vld [vmem:[%s1251 + $0x20] sm:$0xf]
  %v1261 = vld [vmem:[%s1251 + $0x24] sm:$0xf]
  %v1262 = vld [vmem:[%s1251 + $0x28] sm:$0xf]
  %v1263 = vld [vmem:[%s1251 + $0x2c] sm:$0xf]
  %v1264 = vld [vmem:[%s1251 + $0x30] sm:$0xf]
  %v1265 = vld [vmem:[%s1251 + $0x34] sm:$0xf]
  %v1266 = vld [vmem:[%s1251 + $0x38] sm:$0xf]
  %v1267 = vld [vmem:[%s1251 + $0x3c] sm:$0xf]
  %v1268 = vld [vmem:[%s1251 + $0x40] sm:$0xf]
  %v1269 = vld [vmem:[%s1251 + $0x44] sm:$0xf]
  %v1270 = vld [vmem:[%s1251 + $0x48] sm:$0xf]
  %v1271 = vld [vmem:[%s1251 + $0x4c] sm:$0xf]
  %v1272 = vld [vmem:[%s1251 + $0x50] sm:$0xf]
  %v1273 = vld [vmem:[%s1251 + $0x54] sm:$0xf]
  %v1274 = vld [vmem:[%s1251 + $0x58] sm:$0xf]
  %v1275 = vld [vmem:[%s1251 + $0x5c] sm:$0xf]
  %v1276 = vld [vmem:[%s1251 + $0x60] sm:$0x3]
  %v1302 = vunpack.c.l.b16 %v1252
  %v1303 = vunpack.c.l.b16 %v1253
  %v1304 = vunpack.c.l.b16 %v1254
  %v1305 = vunpack.c.l.b16 %v1255
  %v1306 = vunpack.c.l.b16 %v1256
  %v1307 = vunpack.c.l.b16 %v1257
  %v1308 = vunpack.c.l.b16 %v1258
  %v1309 = vunpack.c.l.b16 %v1259
  %v1310 = vunpack.c.l.b16 %v1260
  %v1311 = vunpack.c.l.b16 %v1261
  %v1312 = vunpack.c.l.b16 %v1262
  %v1313 = vunpack.c.l.b16 %v1263
  %v1314 = vunpack.c.l.b16 %v1264
  %v1315 = vunpack.c.l.b16 %v1265
  %v1316 = vunpack.c.l.b16 %v1266
  %v1317 = vunpack.c.l.b16 %v1267
  %v1318 = vunpack.c.l.b16 %v1268
  %v1319 = vunpack.c.l.b16 %v1269
  %v1320 = vunpack.c.l.b16 %v1270
  %v1321 = vunpack.c.l.b16 %v1271
  %v1322 = vunpack.c.l.b16 %v1272
  %v1323 = vunpack.c.l.b16 %v1273
  %v1324 = vunpack.c.l.b16 %v1274
  %v1325 = vunpack.c.l.b16 %v1275
  %v1326 = vunpack.c.l.b16 %v1276
  %v1327 = vpack.c.b16 %v1303, %v1302
  %v1328 = vpack.c.b16 %v1305, %v1304
  %v1329 = vpack.c.b16 %v1307, %v1306
  %v1330 = vpack.c.b16 %v1309, %v1308
  %v1331 = vpack.c.b16 %v1311, %v1310
  %v1332 = vpack.c.b16 %v1313, %v1312
  %v1333 = vpack.c.b16 %v1315, %v1314
  %v1334 = vpack.c.b16 %v1317, %v1316
  %v1335 = vpack.c.b16 %v1319, %v1318
  %v1336 = vpack.c.b16 %v1321, %v1320
  %v1337 = vpack.c.b16 %v1323, %v1322
  %v1338 = vpack.c.b16 %v1325, %v1324
  %v1339 = vpack.c.b16 %v1326, %v1326
  %v1353 = vsel %vm321, %v1339, 0
  %1355 = vmatprep.subr.bf16.mxu0 0
  %1356 = vmatpush1.bf16.msra.mxu0 %v1327
  %1357 = vmatprep.subr.bf16.mxu0 0
  %1358 = vmatpush1.bf16.msra.mxu0 %v1328
  %1359 = vmatprep.subr.bf16.mxu0 0
  %1360 = vmatpush1.bf16.msra.mxu0 %v1329
  %1361 = vmatprep.subr.bf16.mxu0 0
  %1362 = vmatpush1.bf16.msra.mxu0 %v1330
  %1363 = vmatprep.subr.bf16.mxu0 0
  %1364 = vmatpush1.bf16.msra.mxu0 %v1331
  %1365 = vmatprep.subr.bf16.mxu0 0
  %1366 = vmatpush1.bf16.msra.mxu0 %v1332
  %1367 = vmatprep.subr.bf16.mxu0 0
  %1368 = vmatpush1.bf16.msra.mxu0 %v1333
  %1369 = vmatprep.subr.bf16.mxu0 0
  %1370 = vmatpush1.bf16.msra.mxu0 %v1334
  %1371 = vmatprep.subr.bf16.mxu0 0
  %1372 = vmatpush1.bf16.msra.mxu0 %v1335
  %1373 = vmatprep.subr.bf16.mxu0 0
  %1374 = vmatpush1.bf16.msra.mxu0 %v1336
  %1375 = vmatprep.subr.bf16.mxu0 0
  %1376 = vmatpush1.bf16.msra.mxu0 %v1337
  %1377 = vmatprep.subr.bf16.mxu0 0
  %1378 = vmatpush1.bf16.msra.mxu0 %v1338
  %1379 = vmatprep.subr.bf16.mxu0 0
  %1380 = vmatpush1.bf16.msra.mxu0 %v1353
  %1381 = vmatprep.subr.bf16.mxu0 0
  %1382 = vmatpush1.bf16.msra.mxu0 0
  %1383 = vmatprep.subr.bf16.mxu0 0
  %1384 = vmatpush1.bf16.msra.mxu0 0
  %1385 = vmatprep.subr.bf16.mxu0 0
  %1386 = vmatpush1.bf16.msra.mxu0 0
  %1387 = vmatprep.mubr.bf16.mxu0 %v319
  %1388 = vmatmul.mubr.bf16.gmra.mrb[0].mxu0 %v215
  %v1389 = vpop.f32.mrb[0].mxu0
  %v1390 = vadd.f32 0.0, %v1389
  %v1391 = vpop.f32.mrb[0].mxu0
  %v1392 = vpop.f32.mrb[0].mxu0
  %v1393 = vadd.f32 0.0, %v1392
  %v1394 = vpop.f32.mrb[0].mxu0
  %1395 = vdwg.mxu0
  %v1396 = vpack.c.bf16 %v1393, %v1390
  %1397 = vst.msk [vmem:[#allocation2 + $0x38] sm:$0xff] %vm367, %v1396
  %s1398 = scalar_lea.vmem %s4, 800
  %v1399 = vld [vmem:[%s1398] sm:$0xf]
  %v1400 = vld [vmem:[%s1398 + $0x4] sm:$0xf]
  %v1401 = vld [vmem:[%s1398 + $0x8] sm:$0xf]
  %v1402 = vld [vmem:[%s1398 + $0xc] sm:$0xf]
  %v1403 = vld [vmem:[%s1398 + $0x10] sm:$0xf]
  %v1404 = vld [vmem:[%s1398 + $0x14] sm:$0xf]
  %v1405 = vld [vmem:[%s1398 + $0x18] sm:$0xf]
  %v1406 = vld [vmem:[%s1398 + $0x1c] sm:$0xf]
  %v1407 = vld [vmem:[%s1398 + $0x20] sm:$0xf]
  %v1408 = vld [vmem:[%s1398 + $0x24] sm:$0xf]
  %v1409 = vld [vmem:[%s1398 + $0x28] sm:$0xf]
  %v1410 = vld [vmem:[%s1398 + $0x2c] sm:$0xf]
  %v1411 = vld [vmem:[%s1398 + $0x30] sm:$0xf]
  %v1412 = vld [vmem:[%s1398 + $0x34] sm:$0xf]
  %v1413 = vld [vmem:[%s1398 + $0x38] sm:$0xf]
  %v1414 = vld [vmem:[%s1398 + $0x3c] sm:$0xf]
  %v1415 = vld [vmem:[%s1398 + $0x40] sm:$0xf]
  %v1416 = vld [vmem:[%s1398 + $0x44] sm:$0xf]
  %v1417 = vld [vmem:[%s1398 + $0x48] sm:$0xf]
  %v1418 = vld [vmem:[%s1398 + $0x4c] sm:$0xf]
  %v1419 = vld [vmem:[%s1398 + $0x50] sm:$0xf]
  %v1420 = vld [vmem:[%s1398 + $0x54] sm:$0xf]
  %v1421 = vld [vmem:[%s1398 + $0x58] sm:$0xf]
  %v1422 = vld [vmem:[%s1398 + $0x5c] sm:$0xf]
  %v1423 = vld [vmem:[%s1398 + $0x60] sm:$0x3]
  %v1449 = vunpack.c.l.b16 %v1399
  %v1450 = vunpack.c.l.b16 %v1400
  %v1451 = vunpack.c.l.b16 %v1401
  %v1452 = vunpack.c.l.b16 %v1402
  %v1453 = vunpack.c.l.b16 %v1403
  %v1454 = vunpack.c.l.b16 %v1404
  %v1455 = vunpack.c.l.b16 %v1405
  %v1456 = vunpack.c.l.b16 %v1406
  %v1457 = vunpack.c.l.b16 %v1407
  %v1458 = vunpack.c.l.b16 %v1408
  %v1459 = vunpack.c.l.b16 %v1409
  %v1460 = vunpack.c.l.b16 %v1410
  %v1461 = vunpack.c.l.b16 %v1411
  %v1462 = vunpack.c.l.b16 %v1412
  %v1463 = vunpack.c.l.b16 %v1413
  %v1464 = vunpack.c.l.b16 %v1414
  %v1465 = vunpack.c.l.b16 %v1415
  %v1466 = vunpack.c.l.b16 %v1416
  %v1467 = vunpack.c.l.b16 %v1417
  %v1468 = vunpack.c.l.b16 %v1418
  %v1469 = vunpack.c.l.b16 %v1419
  %v1470 = vunpack.c.l.b16 %v1420
  %v1471 = vunpack.c.l.b16 %v1421
  %v1472 = vunpack.c.l.b16 %v1422
  %v1473 = vunpack.c.l.b16 %v1423
  %v1474 = vpack.c.b16 %v1450, %v1449
  %v1475 = vpack.c.b16 %v1452, %v1451
  %v1476 = vpack.c.b16 %v1454, %v1453
  %v1477 = vpack.c.b16 %v1456, %v1455
  %v1478 = vpack.c.b16 %v1458, %v1457
  %v1479 = vpack.c.b16 %v1460, %v1459
  %v1480 = vpack.c.b16 %v1462, %v1461
  %v1481 = vpack.c.b16 %v1464, %v1463
  %v1482 = vpack.c.b16 %v1466, %v1465
  %v1483 = vpack.c.b16 %v1468, %v1467
  %v1484 = vpack.c.b16 %v1470, %v1469
  %v1485 = vpack.c.b16 %v1472, %v1471
  %v1486 = vpack.c.b16 %v1473, %v1473
  %v1500 = vsel %vm321, %v1486, 0
  %1502 = vmatprep.subr.bf16.mxu0 0
  %1503 = vmatpush1.bf16.msra.mxu0 %v1474
  %1504 = vmatprep.subr.bf16.mxu0 0
  %1505 = vmatpush1.bf16.msra.mxu0 %v1475
  %1506 = vmatprep.subr.bf16.mxu0 0
  %1507 = vmatpush1.bf16.msra.mxu0 %v1476
  %1508 = vmatprep.subr.bf16.mxu0 0
  %1509 = vmatpush1.bf16.msra.mxu0 %v1477
  %1510 = vmatprep.subr.bf16.mxu0 0
  %1511 = vmatpush1.bf16.msra.mxu0 %v1478
  %1512 = vmatprep.subr.bf16.mxu0 0
  %1513 = vmatpush1.bf16.msra.mxu0 %v1479
  %1514 = vmatprep.subr.bf16.mxu0 0
  %1515 = vmatpush1.bf16.msra.mxu0 %v1480
  %1516 = vmatprep.subr.bf16.mxu0 0
  %1517 = vmatpush1.bf16.msra.mxu0 %v1481
  %1518 = vmatprep.subr.bf16.mxu0 0
  %1519 = vmatpush1.bf16.msra.mxu0 %v1482
  %1520 = vmatprep.subr.bf16.mxu0 0
  %1521 = vmatpush1.bf16.msra.mxu0 %v1483
  %1522 = vmatprep.subr.bf16.mxu0 0
  %1523 = vmatpush1.bf16.msra.mxu0 %v1484
  %1524 = vmatprep.subr.bf16.mxu0 0
  %1525 = vmatpush1.bf16.msra.mxu0 %v1485
  %1526 = vmatprep.subr.bf16.mxu0 0
  %1527 = vmatpush1.bf16.msra.mxu0 %v1500
  %1528 = vmatprep.subr.bf16.mxu0 0
  %1529 = vmatpush1.bf16.msra.mxu0 0
  %1530 = vmatprep.subr.bf16.mxu0 0
  %1531 = vmatpush1.bf16.msra.mxu0 0
  %1532 = vmatprep.subr.bf16.mxu0 0
  %1533 = vmatpush1.bf16.msra.mxu0 0
  %1534 = vmatprep.mubr.bf16.mxu0 %v319
  %1535 = vmatmul.mubr.bf16.gmra.mrb[0].mxu0 %v215
  %v1536 = vpop.f32.mrb[0].mxu0
  %v1537 = vadd.f32 0.0, %v1536
  %v1538 = vpop.f32.mrb[0].mxu0
  %v1539 = vpop.f32.mrb[0].mxu0
  %v1540 = vadd.f32 0.0, %v1539
  %v1541 = vpop.f32.mrb[0].mxu0
  %1542 = vdwg.mxu0
  %v1543 = vpack.c.bf16 %v1540, %v1537
  %1544 = vst.msk [vmem:[#allocation2 + $0x40] sm:$0xff] %vm367, %v1543
  %v1545 = vld [vmem:[#allocation2] sm:$0xff]
  %v1546 = vld [vmem:[#allocation2 + $0x8] sm:$0xff]
  %v1547 = vld [vmem:[#allocation2 + $0x10] sm:$0xff]
  %v1548 = vld [vmem:[#allocation2 + $0x18] sm:$0xff]
  %v1549 = vld [vmem:[#allocation2 + $0x20] sm:$0xff]
  %v1550 = vld [vmem:[#allocation2 + $0x28] sm:$0xff]
  %v1551 = vld [vmem:[#allocation2 + $0x30] sm:$0xff]
  %v1552 = vld [vmem:[#allocation2 + $0x38] sm:$0xff]
  %v1553 = vld [vmem:[#allocation2 + $0x40] sm:$0xff]
  %1555 = vset.pattern.permute.xlu0 0
  %1556 = vperm.xlu0 %1555, %v213
  %v1557 = vpop.permute.xlu0 %1556
  %1560 = vset.pattern.permute.xlu0 0
  %1561 = vperm.xlu0 %1560, %v214
  %v1562 = vpop.permute.xlu0 %1561
  %v1566 = vunpack.c.l.b16 %v210
  %v1567 = vunpack.c.h.b16 %v210
  %v1568 = vunpack.c.l.b16 %v211
  %v1569 = vunpack.c.h.b16 %v211
  %v1570 = vpack.c.b16 %v1568, %v1566
  %v1571 = vpack.c.b16 %v1569, %v1567
  %v1574 = vsel %vm158, %v1571, 0
  %1576 = vmatprep.subr.bf16.mxu0 0
  %1577 = vmatpush1.bf16.msra.mxu0 %v1545
  %1578 = vmatprep.subr.bf16.mxu0 0
  %1579 = vmatpush1.bf16.msra.mxu0 %v1546
  %1580 = vmatprep.subr.bf16.mxu0 0
  %1581 = vmatpush1.bf16.msra.mxu0 %v1547
  %1582 = vmatprep.subr.bf16.mxu0 0
  %1583 = vmatpush1.bf16.msra.mxu0 %v1548
  %1584 = vmatprep.subr.bf16.mxu0 0
  %1585 = vmatpush1.bf16.msra.mxu0 %v1549
  %1586 = vmatprep.subr.bf16.mxu0 0
  %1587 = vmatpush1.bf16.msra.mxu0 %v1550
  %1588 = vmatprep.subr.bf16.mxu0 0
  %1589 = vmatpush1.bf16.msra.mxu0 %v1551
  %1590 = vmatprep.subr.bf16.mxu0 0
  %1591 = vmatpush1.bf16.msra.mxu0 %v1552
  %1592 = vmatprep.subr.bf16.mxu0 0
  %1593 = vmatpush1.bf16.msra.mxu0 %v1553
  %1594 = vmatprep.subr.bf16.mxu0 0
  %1595 = vmatpush1.bf16.msra.mxu0 0
  %1596 = vmatprep.subr.bf16.mxu0 0
  %1597 = vmatpush1.bf16.msra.mxu0 0
  %1598 = vmatprep.subr.bf16.mxu0 0
  %1599 = vmatpush1.bf16.msra.mxu0 0
  %1600 = vmatprep.subr.bf16.mxu0 0
  %1601 = vmatpush1.bf16.msra.mxu0 0
  %1602 = vmatprep.subr.bf16.mxu0 0
  %1603 = vmatpush1.bf16.msra.mxu0 0
  %1604 = vmatprep.subr.bf16.mxu0 0
  %1605 = vmatpush1.bf16.msra.mxu0 0
  %1606 = vmatprep.subr.bf16.mxu0 0
  %1607 = vmatpush1.bf16.msra.mxu0 0
  %1608 = vmatprep.mubr.bf16.mxu0 %v1574
  %1609 = vmatmul.mubr.bf16.gmra.mrb[0].mxu0 %v1570
  %v1610 = vpop.f32.mrb[0].mxu0
  %v1611 = vadd.f32 %v1557, %v1610
  %v1612 = vpop.f32.mrb[0].mxu0
  %v1613 = vpop.f32.mrb[0].mxu0
  %v1614 = vadd.f32 %v1562, %v1613
  %v1615 = vpop.f32.mrb[0].mxu0
  %1616 = vdwg.mxu0
  %v1617 = vmax.f32 %v1611, 0.0
  %v1618 = vmax.f32 %v1614, 0.0
  %s1619 = scalar_lea.vmem %s2, 32
  %v1620 = vld [vmem:[%s1619] sm:$0xff]
  %v1621 = vld [vmem:[%s1619 + $0x8] sm:$0xff]
  %s1622 = scalar_lea.vmem %s3, 32
  %v1623 = vld [vmem:[%s1622] sm:$0xff]
  %v1624 = vld [vmem:[%s1622 + $0x8] sm:$0xff]
  %v1625 = vpack.c.bf16 %v1618, %v1617
  %v1626 = vld [vmem:[%s5] sm:$0xf]
  %v1627 = vld [vmem:[%s5 + $0x4] sm:$0xf]
  %v1628 = vld [vmem:[%s5 + $0x8] sm:$0xf]
  %v1629 = vld [vmem:[%s5 + $0xc] sm:$0xf]
  %v1630 = vld [vmem:[%s5 + $0x10] sm:$0xf]
  %v1631 = vld [vmem:[%s5 + $0x14] sm:$0xf]
  %v1632 = vld [vmem:[%s5 + $0x18] sm:$0x1]
  %v1640 = vunpack.c.l.b16 %v1626
  %v1641 = vunpack.c.l.b16 %v1627
  %v1642 = vunpack.c.l.b16 %v1628
  %v1643 = vunpack.c.l.b16 %v1629
  %v1644 = vunpack.c.l.b16 %v1630
  %v1645 = vunpack.c.l.b16 %v1631
  %v1646 = vunpack.c.l.b16 %v1632
  %v1647 = vpack.c.b16 %v1641, %v1640
  %v1648 = vpack.c.b16 %v1643, %v1642
  %v1649 = vpack.c.b16 %v1645, %v1644
  %v1650 = vpack.c.b16 %v1646, %v1646
  %v1655 = vsel %vm367, %v1625, 0
  %vm1657 = vcmask 1040384
  %v1658 = vsel 0, 4294967295, 65535
  %v1659 = vsel %vm1657, %v1658, 0
  %v1661 = vand.u32 %v1650, %v1659
  %1663 = vmatprep.subr.bf16.mxu0 0
  %1664 = vmatpush1.bf16.msra.mxu0 %v1647
  %1665 = vmatprep.subr.bf16.mxu0 0
  %1666 = vmatpush1.bf16.msra.mxu0 %v1648
  %1667 = vmatprep.subr.bf16.mxu0 0
  %1668 = vmatpush1.bf16.msra.mxu0 %v1649
  %1669 = vmatprep.subr.bf16.mxu0 0
  %1670 = vmatpush1.bf16.msra.mxu0 %v1661
  %1671 = vmatprep.subr.bf16.mxu0 0
  %1672 = vmatpush1.bf16.msra.mxu0 0
  %1673 = vmatprep.subr.bf16.mxu0 0
  %1674 = vmatpush1.bf16.msra.mxu0 0
  %1675 = vmatprep.subr.bf16.mxu0 0
  %1676 = vmatpush1.bf16.msra.mxu0 0
  %1677 = vmatprep.subr.bf16.mxu0 0
  %1678 = vmatpush1.bf16.msra.mxu0 0
  %1679 = vmatprep.subr.bf16.mxu0 0
  %1680 = vmatpush1.bf16.msra.mxu0 0
  %1681 = vmatprep.subr.bf16.mxu0 0
  %1682 = vmatpush1.bf16.msra.mxu0 0
  %1683 = vmatprep.subr.bf16.mxu0 0
  %1684 = vmatpush1.bf16.msra.mxu0 0
  %1685 = vmatprep.subr.bf16.mxu0 0
  %1686 = vmatpush1.bf16.msra.mxu0 0
  %1687 = vmatprep.subr.bf16.mxu0 0
  %1688 = vmatpush1.bf16.msra.mxu0 0
  %1689 = vmatprep.subr.bf16.mxu0 0
  %1690 = vmatpush1.bf16.msra.mxu0 0
  %1691 = vmatprep.subr.bf16.mxu0 0
  %1692 = vmatpush1.bf16.msra.mxu0 0
  %1693 = vmatprep.subr.bf16.mxu0 0
  %1694 = vmatpush1.bf16.msra.mxu0 0
  %1695 = vmatprep.mubr.bf16.mxu0 0
  %1696 = vmatmul.mubr.bf16.gmra.mrb[0].mxu0 %v1655
  %v1697 = vpop.f32.mrb[0].mxu0
  %v1698 = vadd.f32 0.0, %v1697
  %v1699 = vpop.f32.mrb[0].mxu0
  %v1700 = vpop.f32.mrb[0].mxu0
  %v1701 = vadd.f32 0.0, %v1700
  %v1702 = vpop.f32.mrb[0].mxu0
  %1703 = vdwg.mxu0
  %v1704 = vpack.c.bf16 %v1701, %v1698
  %1705 = vst.msk [vmem:[#allocation3] sm:$0xff] %vm158, %v1704
  %s1706 = scalar_lea.vmem %s5, 28
  %v1707 = vld [vmem:[%s1706] sm:$0xf]
  %v1708 = vld [vmem:[%s1706 + $0x4] sm:$0xf]
  %v1709 = vld [vmem:[%s1706 + $0x8] sm:$0xf]
  %v1710 = vld [vmem:[%s1706 + $0xc] sm:$0xf]
  %v1711 = vld [vmem:[%s1706 + $0x10] sm:$0xf]
  %v1712 = vld [vmem:[%s1706 + $0x14] sm:$0xf]
  %v1713 = vld [vmem:[%s1706 + $0x18] sm:$0x1]
  %v1721 = vunpack.c.l.b16 %v1707
  %v1722 = vunpack.c.l.b16 %v1708
  %v1723 = vunpack.c.l.b16 %v1709
  %v1724 = vunpack.c.l.b16 %v1710
  %v1725 = vunpack.c.l.b16 %v1711
  %v1726 = vunpack.c.l.b16 %v1712
  %v1727 = vunpack.c.l.b16 %v1713
  %v1728 = vpack.c.b16 %v1722, %v1721
  %v1729 = vpack.c.b16 %v1724, %v1723
  %v1730 = vpack.c.b16 %v1726, %v1725
  %v1731 = vpack.c.b16 %v1727, %v1727
  %v1736 = vand.u32 %v1731, %v1659
  %1738 = vmatprep.subr.bf16.mxu0 0
  %1739 = vmatpush1.bf16.msra.mxu0 %v1728
  %1740 = vmatprep.subr.bf16.mxu0 0
  %1741 = vmatpush1.bf16.msra.mxu0 %v1729
  %1742 = vmatprep.subr.bf16.mxu0 0
  %1743 = vmatpush1.bf16.msra.mxu0 %v1730
  %1744 = vmatprep.subr.bf16.mxu0 0
  %1745 = vmatpush1.bf16.msra.mxu0 %v1736
  %1746 = vmatprep.subr.bf16.mxu0 0
  %1747 = vmatpush1.bf16.msra.mxu0 0
  %1748 = vmatprep.subr.bf16.mxu0 0
  %1749 = vmatpush1.bf16.msra.mxu0 0
  %1750 = vmatprep.subr.bf16.mxu0 0
  %1751 = vmatpush1.bf16.msra.mxu0 0
  %1752 = vmatprep.subr.bf16.mxu0 0
  %1753 = vmatpush1.bf16.msra.mxu0 0
  %1754 = vmatprep.subr.bf16.mxu0 0
  %1755 = vmatpush1.bf16.msra.mxu0 0
  %1756 = vmatprep.subr.bf16.mxu0 0
  %1757 = vmatpush1.bf16.msra.mxu0 0
  %1758 = vmatprep.subr.bf16.mxu0 0
  %1759 = vmatpush1.bf16.msra.mxu0 0
  %1760 = vmatprep.subr.bf16.mxu0 0
  %1761 = vmatpush1.bf16.msra.mxu0 0
  %1762 = vmatprep.subr.bf16.mxu0 0
  %1763 = vmatpush1.bf16.msra.mxu0 0
  %1764 = vmatprep.subr.bf16.mxu0 0
  %1765 = vmatpush1.bf16.msra.mxu0 0
  %1766 = vmatprep.subr.bf16.mxu0 0
  %1767 = vmatpush1.bf16.msra.mxu0 0
  %1768 = vmatprep.subr.bf16.mxu0 0
  %1769 = vmatpush1.bf16.msra.mxu0 0
  %1770 = vmatprep.mubr.bf16.mxu0 0
  %1771 = vmatmul.mubr.bf16.gmra.mrb[0].mxu0 %v1655
  %v1772 = vpop.f32.mrb[0].mxu0
  %v1773 = vadd.f32 0.0, %v1772
  %v1774 = vpop.f32.mrb[0].mxu0
  %v1775 = vpop.f32.mrb[0].mxu0
  %v1776 = vadd.f32 0.0, %v1775
  %v1777 = vpop.f32.mrb[0].mxu0
  %1778 = vdwg.mxu0
  %v1779 = vpack.c.bf16 %v1776, %v1773
  %1780 = vst.msk [vmem:[#allocation3 + $0x8] sm:$0xff] %vm158, %v1779
  %s1781 = scalar_lea.vmem %s5, 56
  %v1782 = vld [vmem:[%s1781] sm:$0xf]
  %v1783 = vld [vmem:[%s1781 + $0x4] sm:$0xf]
  %v1784 = vld [vmem:[%s1781 + $0x8] sm:$0xf]
  %v1785 = vld [vmem:[%s1781 + $0xc] sm:$0xf]
  %v1786 = vld [vmem:[%s1781 + $0x10] sm:$0xf]
  %v1787 = vld [vmem:[%s1781 + $0x14] sm:$0xf]
  %v1788 = vld [vmem:[%s1781 + $0x18] sm:$0x1]
  %v1796 = vunpack.c.l.b16 %v1782
  %v1797 = vunpack.c.l.b16 %v1783
  %v1798 = vunpack.c.l.b16 %v1784
  %v1799 = vunpack.c.l.b16 %v1785
  %v1800 = vunpack.c.l.b16 %v1786
  %v1801 = vunpack.c.l.b16 %v1787
  %v1802 = vunpack.c.l.b16 %v1788
  %v1803 = vpack.c.b16 %v1797, %v1796
  %v1804 = vpack.c.b16 %v1799, %v1798
  %v1805 = vpack.c.b16 %v1801, %v1800
  %v1806 = vpack.c.b16 %v1802, %v1802
  %v1811 = vand.u32 %v1806, %v1659
  %1813 = vmatprep.subr.bf16.mxu0 0
  %1814 = vmatpush1.bf16.msra.mxu0 %v1803
  %1815 = vmatprep.subr.bf16.mxu0 0
  %1816 = vmatpush1.bf16.msra.mxu0 %v1804
  %1817 = vmatprep.subr.bf16.mxu0 0
  %1818 = vmatpush1.bf16.msra.mxu0 %v1805
  %1819 = vmatprep.subr.bf16.mxu0 0
  %1820 = vmatpush1.bf16.msra.mxu0 %v1811
  %1821 = vmatprep.subr.bf16.mxu0 0
  %1822 = vmatpush1.bf16.msra.mxu0 0
  %1823 = vmatprep.subr.bf16.mxu0 0
  %1824 = vmatpush1.bf16.msra.mxu0 0
  %1825 = vmatprep.subr.bf16.mxu0 0
  %1826 = vmatpush1.bf16.msra.mxu0 0
  %1827 = vmatprep.subr.bf16.mxu0 0
  %1828 = vmatpush1.bf16.msra.mxu0 0
  %1829 = vmatprep.subr.bf16.mxu0 0
  %1830 = vmatpush1.bf16.msra.mxu0 0
  %1831 = vmatprep.subr.bf16.mxu0 0
  %1832 = vmatpush1.bf16.msra.mxu0 0
  %1833 = vmatprep.subr.bf16.mxu0 0
  %1834 = vmatpush1.bf16.msra.mxu0 0
  %1835 = vmatprep.subr.bf16.mxu0 0
  %1836 = vmatpush1.bf16.msra.mxu0 0
  %1837 = vmatprep.subr.bf16.mxu0 0
  %1838 = vmatpush1.bf16.msra.mxu0 0
  %1839 = vmatprep.subr.bf16.mxu0 0
  %1840 = vmatpush1.bf16.msra.mxu0 0
  %1841 = vmatprep.subr.bf16.mxu0 0
  %1842 = vmatpush1.bf16.msra.mxu0 0
  %1843 = vmatprep.subr.bf16.mxu0 0
  %1844 = vmatpush1.bf16.msra.mxu0 0
  %1845 = vmatprep.mubr.bf16.mxu0 0
  %1846 = vmatmul.mubr.bf16.gmra.mrb[0].mxu0 %v1655
  %v1847 = vpop.f32.mrb[0].mxu0
  %v1848 = vadd.f32 0.0, %v1847
  %v1849 = vpop.f32.mrb[0].mxu0
  %v1850 = vpop.f32.mrb[0].mxu0
  %v1851 = vadd.f32 0.0, %v1850
  %v1852 = vpop.f32.mrb[0].mxu0
  %1853 = vdwg.mxu0
  %v1854 = vpack.c.bf16 %v1851, %v1848
  %1855 = vst.msk [vmem:[#allocation3 + $0x10] sm:$0xff] %vm158, %v1854
  %s1856 = scalar_lea.vmem %s5, 84
  %v1857 = vld [vmem:[%s1856] sm:$0xf]
  %v1858 = vld [vmem:[%s1856 + $0x4] sm:$0xf]
  %v1859 = vld [vmem:[%s1856 + $0x8] sm:$0xf]
  %v1860 = vld [vmem:[%s1856 + $0xc] sm:$0xf]
  %v1861 = vld [vmem:[%s1856 + $0x10] sm:$0xf]
  %v1862 = vld [vmem:[%s1856 + $0x14] sm:$0xf]
  %v1863 = vld [vmem:[%s1856 + $0x18] sm:$0x1]
  %v1871 = vunpack.c.l.b16 %v1857
  %v1872 = vunpack.c.l.b16 %v1858
  %v1873 = vunpack.c.l.b16 %v1859
  %v1874 = vunpack.c.l.b16 %v1860
  %v1875 = vunpack.c.l.b16 %v1861
  %v1876 = vunpack.c.l.b16 %v1862
  %v1877 = vunpack.c.l.b16 %v1863
  %v1878 = vpack.c.b16 %v1872, %v1871
  %v1879 = vpack.c.b16 %v1874, %v1873
  %v1880 = vpack.c.b16 %v1876, %v1875
  %v1881 = vpack.c.b16 %v1877, %v1877
  %v1886 = vand.u32 %v1881, %v1659
  %1888 = vmatprep.subr.bf16.mxu0 0
  %1889 = vmatpush1.bf16.msra.mxu0 %v1878
  %1890 = vmatprep.subr.bf16.mxu0 0
  %1891 = vmatpush1.bf16.msra.mxu0 %v1879
  %1892 = vmatprep.subr.bf16.mxu0 0
  %1893 = vmatpush1.bf16.msra.mxu0 %v1880
  %1894 = vmatprep.subr.bf16.mxu0 0
  %1895 = vmatpush1.bf16.msra.mxu0 %v1886
  %1896 = vmatprep.subr.bf16.mxu0 0
  %1897 = vmatpush1.bf16.msra.mxu0 0
  %1898 = vmatprep.subr.bf16.mxu0 0
  %1899 = vmatpush1.bf16.msra.mxu0 0
  %1900 = vmatprep.subr.bf16.mxu0 0
  %1901 = vmatpush1.bf16.msra.mxu0 0
  %1902 = vmatprep.subr.bf16.mxu0 0
  %1903 = vmatpush1.bf16.msra.mxu0 0
  %1904 = vmatprep.subr.bf16.mxu0 0
  %1905 = vmatpush1.bf16.msra.mxu0 0
  %1906 = vmatprep.subr.bf16.mxu0 0
  %1907 = vmatpush1.bf16.msra.mxu0 0
  %1908 = vmatprep.subr.bf16.mxu0 0
  %1909 = vmatpush1.bf16.msra.mxu0 0
  %1910 = vmatprep.subr.bf16.mxu0 0
  %1911 = vmatpush1.bf16.msra.mxu0 0
  %1912 = vmatprep.subr.bf16.mxu0 0
  %1913 = vmatpush1.bf16.msra.mxu0 0
  %1914 = vmatprep.subr.bf16.mxu0 0
  %1915 = vmatpush1.bf16.msra.mxu0 0
  %1916 = vmatprep.subr.bf16.mxu0 0
  %1917 = vmatpush1.bf16.msra.mxu0 0
  %1918 = vmatprep.subr.bf16.mxu0 0
  %1919 = vmatpush1.bf16.msra.mxu0 0
  %1920 = vmatprep.mubr.bf16.mxu0 0
  %1921 = vmatmul.mubr.bf16.gmra.mrb[0].mxu0 %v1655
  %v1922 = vpop.f32.mrb[0].mxu0
  %v1923 = vadd.f32 0.0, %v1922
  %v1924 = vpop.f32.mrb[0].mxu0
  %v1925 = vpop.f32.mrb[0].mxu0
  %v1926 = vadd.f32 0.0, %v1925
  %v1927 = vpop.f32.mrb[0].mxu0
  %1928 = vdwg.mxu0
  %v1929 = vpack.c.bf16 %v1926, %v1923
  %1930 = vst.msk [vmem:[#allocation3 + $0x18] sm:$0xff] %vm158, %v1929
  %s1931 = scalar_lea.vmem %s5, 112
  %v1932 = vld [vmem:[%s1931] sm:$0xf]
  %v1933 = vld [vmem:[%s1931 + $0x4] sm:$0xf]
  %v1934 = vld [vmem:[%s1931 + $0x8] sm:$0xf]
  %v1935 = vld [vmem:[%s1931 + $0xc] sm:$0xf]
  %v1936 = vld [vmem:[%s1931 + $0x10] sm:$0xf]
  %v1937 = vld [vmem:[%s1931 + $0x14] sm:$0xf]
  %v1938 = vld [vmem:[%s1931 + $0x18] sm:$0x1]
  %v1946 = vunpack.c.l.b16 %v1932
  %v1947 = vunpack.c.l.b16 %v1933
  %v1948 = vunpack.c.l.b16 %v1934
  %v1949 = vunpack.c.l.b16 %v1935
  %v1950 = vunpack.c.l.b16 %v1936
  %v1951 = vunpack.c.l.b16 %v1937
  %v1952 = vunpack.c.l.b16 %v1938
  %v1953 = vpack.c.b16 %v1947, %v1946
  %v1954 = vpack.c.b16 %v1949, %v1948
  %v1955 = vpack.c.b16 %v1951, %v1950
  %v1956 = vpack.c.b16 %v1952, %v1952
  %v1961 = vand.u32 %v1956, %v1659
  %1963 = vmatprep.subr.bf16.mxu0 0
  %1964 = vmatpush1.bf16.msra.mxu0 %v1953
  %1965 = vmatprep.subr.bf16.mxu0 0
  %1966 = vmatpush1.bf16.msra.mxu0 %v1954
  %1967 = vmatprep.subr.bf16.mxu0 0
  %1968 = vmatpush1.bf16.msra.mxu0 %v1955
  %1969 = vmatprep.subr.bf16.mxu0 0
  %1970 = vmatpush1.bf16.msra.mxu0 %v1961
  %1971 = vmatprep.subr.bf16.mxu0 0
  %1972 = vmatpush1.bf16.msra.mxu0 0
  %1973 = vmatprep.subr.bf16.mxu0 0
  %1974 = vmatpush1.bf16.msra.mxu0 0
  %1975 = vmatprep.subr.bf16.mxu0 0
  %1976 = vmatpush1.bf16.msra.mxu0 0
  %1977 = vmatprep.subr.bf16.mxu0 0
  %1978 = vmatpush1.bf16.msra.mxu0 0
  %1979 = vmatprep.subr.bf16.mxu0 0
  %1980 = vmatpush1.bf16.msra.mxu0 0
  %1981 = vmatprep.subr.bf16.mxu0 0
  %1982 = vmatpush1.bf16.msra.mxu0 0
  %1983 = vmatprep.subr.bf16.mxu0 0
  %1984 = vmatpush1.bf16.msra.mxu0 0
  %1985 = vmatprep.subr.bf16.mxu0 0
  %1986 = vmatpush1.bf16.msra.mxu0 0
  %1987 = vmatprep.subr.bf16.mxu0 0
  %1988 = vmatpush1.bf16.msra.mxu0 0
  %1989 = vmatprep.subr.bf16.mxu0 0
  %1990 = vmatpush1.bf16.msra.mxu0 0
  %1991 = vmatprep.subr.bf16.mxu0 0
  %1992 = vmatpush1.bf16.msra.mxu0 0
  %1993 = vmatprep.subr.bf16.mxu0 0
  %1994 = vmatpush1.bf16.msra.mxu0 0
  %1995 = vmatprep.mubr.bf16.mxu0 0
  %1996 = vmatmul.mubr.bf16.gmra.mrb[0].mxu0 %v1655
  %v1997 = vpop.f32.mrb[0].mxu0
  %v1998 = vadd.f32 0.0, %v1997
  %v1999 = vpop.f32.mrb[0].mxu0
  %v2000 = vpop.f32.mrb[0].mxu0
  %v2001 = vadd.f32 0.0, %v2000
  %v2002 = vpop.f32.mrb[0].mxu0
  %2003 = vdwg.mxu0
  %v2004 = vpack.c.bf16 %v2001, %v1998
  %2005 = vst.msk [vmem:[#allocation3 + $0x20] sm:$0xff] %vm158, %v2004
  %s2006 = scalar_lea.vmem %s5, 140
  %v2007 = vld [vmem:[%s2006] sm:$0xf]
  %v2008 = vld [vmem:[%s2006 + $0x4] sm:$0xf]
  %v2009 = vld [vmem:[%s2006 + $0x8] sm:$0xf]
  %v2010 = vld [vmem:[%s2006 + $0xc] sm:$0xf]
  %v2011 = vld [vmem:[%s2006 + $0x10] sm:$0xf]
  %v2012 = vld [vmem:[%s2006 + $0x14] sm:$0xf]
  %v2013 = vld [vmem:[%s2006 + $0x18] sm:$0x1]
  %v2021 = vunpack.c.l.b16 %v2007
  %v2022 = vunpack.c.l.b16 %v2008
  %v2023 = vunpack.c.l.b16 %v2009
  %v2024 = vunpack.c.l.b16 %v2010
  %v2025 = vunpack.c.l.b16 %v2011
  %v2026 = vunpack.c.l.b16 %v2012
  %v2027 = vunpack.c.l.b16 %v2013
  %v2028 = vpack.c.b16 %v2022, %v2021
  %v2029 = vpack.c.b16 %v2024, %v2023
  %v2030 = vpack.c.b16 %v2026, %v2025
  %v2031 = vpack.c.b16 %v2027, %v2027
  %v2036 = vand.u32 %v2031, %v1659
  %2038 = vmatprep.subr.bf16.mxu0 0
  %2039 = vmatpush1.bf16.msra.mxu0 %v2028
  %2040 = vmatprep.subr.bf16.mxu0 0
  %2041 = vmatpush1.bf16.msra.mxu0 %v2029
  %2042 = vmatprep.subr.bf16.mxu0 0
  %2043 = vmatpush1.bf16.msra.mxu0 %v2030
  %2044 = vmatprep.subr.bf16.mxu0 0
  %2045 = vmatpush1.bf16.msra.mxu0 %v2036
  %2046 = vmatprep.subr.bf16.mxu0 0
  %2047 = vmatpush1.bf16.msra.mxu0 0
  %2048 = vmatprep.subr.bf16.mxu0 0
  %2049 = vmatpush1.bf16.msra.mxu0 0
  %2050 = vmatprep.subr.bf16.mxu0 0
  %2051 = vmatpush1.bf16.msra.mxu0 0
  %2052 = vmatprep.subr.bf16.mxu0 0
  %2053 = vmatpush1.bf16.msra.mxu0 0
  %2054 = vmatprep.subr.bf16.mxu0 0
  %2055 = vmatpush1.bf16.msra.mxu0 0
  %2056 = vmatprep.subr.bf16.mxu0 0
  %2057 = vmatpush1.bf16.msra.mxu0 0
  %2058 = vmatprep.subr.bf16.mxu0 0
  %2059 = vmatpush1.bf16.msra.mxu0 0
  %2060 = vmatprep.subr.bf16.mxu0 0
  %2061 = vmatpush1.bf16.msra.mxu0 0
  %2062 = vmatprep.subr.bf16.mxu0 0
  %2063 = vmatpush1.bf16.msra.mxu0 0
  %2064 = vmatprep.subr.bf16.mxu0 0
  %2065 = vmatpush1.bf16.msra.mxu0 0
  %2066 = vmatprep.subr.bf16.mxu0 0
  %2067 = vmatpush1.bf16.msra.mxu0 0
  %2068 = vmatprep.subr.bf16.mxu0 0
  %2069 = vmatpush1.bf16.msra.mxu0 0
  %2070 = vmatprep.mubr.bf16.mxu0 0
  %2071 = vmatmul.mubr.bf16.gmra.mrb[0].mxu0 %v1655
  %v2072 = vpop.f32.mrb[0].mxu0
  %v2073 = vadd.f32 0.0, %v2072
  %v2074 = vpop.f32.mrb[0].mxu0
  %v2075 = vpop.f32.mrb[0].mxu0
  %v2076 = vadd.f32 0.0, %v2075
  %v2077 = vpop.f32.mrb[0].mxu0
  %2078 = vdwg.mxu0
  %v2079 = vpack.c.bf16 %v2076, %v2073
  %2080 = vst.msk [vmem:[#allocation3 + $0x28] sm:$0xff] %vm158, %v2079
  %s2081 = scalar_lea.vmem %s5, 168
  %v2082 = vld [vmem:[%s2081] sm:$0xf]
  %v2083 = vld [vmem:[%s2081 + $0x4] sm:$0xf]
  %v2084 = vld [vmem:[%s2081 + $0x8] sm:$0xf]
  %v2085 = vld [vmem:[%s2081 + $0xc] sm:$0xf]
  %v2086 = vld [vmem:[%s2081 + $0x10] sm:$0xf]
  %v2087 = vld [vmem:[%s2081 + $0x14] sm:$0xf]
  %v2088 = vld [vmem:[%s2081 + $0x18] sm:$0x1]
  %v2096 = vunpack.c.l.b16 %v2082
  %v2097 = vunpack.c.l.b16 %v2083
  %v2098 = vunpack.c.l.b16 %v2084
  %v2099 = vunpack.c.l.b16 %v2085
  %v2100 = vunpack.c.l.b16 %v2086
  %v2101 = vunpack.c.l.b16 %v2087
  %v2102 = vunpack.c.l.b16 %v2088
  %v2103 = vpack.c.b16 %v2097, %v2096
  %v2104 = vpack.c.b16 %v2099, %v2098
  %v2105 = vpack.c.b16 %v2101, %v2100
  %v2106 = vpack.c.b16 %v2102, %v2102
  %v2111 = vand.u32 %v2106, %v1659
  %2113 = vmatprep.subr.bf16.mxu0 0
  %2114 = vmatpush1.bf16.msra.mxu0 %v2103
  %2115 = vmatprep.subr.bf16.mxu0 0
  %2116 = vmatpush1.bf16.msra.mxu0 %v2104
  %2117 = vmatprep.subr.bf16.mxu0 0
  %2118 = vmatpush1.bf16.msra.mxu0 %v2105
  %2119 = vmatprep.subr.bf16.mxu0 0
  %2120 = vmatpush1.bf16.msra.mxu0 %v2111
  %2121 = vmatprep.subr.bf16.mxu0 0
  %2122 = vmatpush1.bf16.msra.mxu0 0
  %2123 = vmatprep.subr.bf16.mxu0 0
  %2124 = vmatpush1.bf16.msra.mxu0 0
  %2125 = vmatprep.subr.bf16.mxu0 0
  %2126 = vmatpush1.bf16.msra.mxu0 0
  %2127 = vmatprep.subr.bf16.mxu0 0
  %2128 = vmatpush1.bf16.msra.mxu0 0
  %2129 = vmatprep.subr.bf16.mxu0 0
  %2130 = vmatpush1.bf16.msra.mxu0 0
  %2131 = vmatprep.subr.bf16.mxu0 0
  %2132 = vmatpush1.bf16.msra.mxu0 0
  %2133 = vmatprep.subr.bf16.mxu0 0
  %2134 = vmatpush1.bf16.msra.mxu0 0
  %2135 = vmatprep.subr.bf16.mxu0 0
  %2136 = vmatpush1.bf16.msra.mxu0 0
  %2137 = vmatprep.subr.bf16.mxu0 0
  %2138 = vmatpush1.bf16.msra.mxu0 0
  %2139 = vmatprep.subr.bf16.mxu0 0
  %2140 = vmatpush1.bf16.msra.mxu0 0
  %2141 = vmatprep.subr.bf16.mxu0 0
  %2142 = vmatpush1.bf16.msra.mxu0 0
  %2143 = vmatprep.subr.bf16.mxu0 0
  %2144 = vmatpush1.bf16.msra.mxu0 0
  %2145 = vmatprep.mubr.bf16.mxu0 0
  %2146 = vmatmul.mubr.bf16.gmra.mrb[0].mxu0 %v1655
  %v2147 = vpop.f32.mrb[0].mxu0
  %v2148 = vadd.f32 0.0, %v2147
  %v2149 = vpop.f32.mrb[0].mxu0
  %v2150 = vpop.f32.mrb[0].mxu0
  %v2151 = vadd.f32 0.0, %v2150
  %v2152 = vpop.f32.mrb[0].mxu0
  %2153 = vdwg.mxu0
  %v2154 = vpack.c.bf16 %v2151, %v2148
  %2155 = vst.msk [vmem:[#allocation3 + $0x30] sm:$0xff] %vm158, %v2154
  %s2156 = scalar_lea.vmem %s5, 196
  %v2157 = vld [vmem:[%s2156] sm:$0xf]
  %v2158 = vld [vmem:[%s2156 + $0x4] sm:$0xf]
  %v2159 = vld [vmem:[%s2156 + $0x8] sm:$0xf]
  %v2160 = vld [vmem:[%s2156 + $0xc] sm:$0xf]
  %v2161 = vld [vmem:[%s2156 + $0x10] sm:$0xf]
  %v2162 = vld [vmem:[%s2156 + $0x14] sm:$0xf]
  %v2163 = vld [vmem:[%s2156 + $0x18] sm:$0x1]
  %v2171 = vunpack.c.l.b16 %v2157
  %v2172 = vunpack.c.l.b16 %v2158
  %v2173 = vunpack.c.l.b16 %v2159
  %v2174 = vunpack.c.l.b16 %v2160
  %v2175 = vunpack.c.l.b16 %v2161
  %v2176 = vunpack.c.l.b16 %v2162
  %v2177 = vunpack.c.l.b16 %v2163
  %v2178 = vpack.c.b16 %v2172, %v2171
  %v2179 = vpack.c.b16 %v2174, %v2173
  %v2180 = vpack.c.b16 %v2176, %v2175
  %v2181 = vpack.c.b16 %v2177, %v2177
  %v2186 = vand.u32 %v2181, %v1659
  %2188 = vmatprep.subr.bf16.mxu0 0
  %2189 = vmatpush1.bf16.msra.mxu0 %v2178
  %2190 = vmatprep.subr.bf16.mxu0 0
  %2191 = vmatpush1.bf16.msra.mxu0 %v2179
  %2192 = vmatprep.subr.bf16.mxu0 0
  %2193 = vmatpush1.bf16.msra.mxu0 %v2180
  %2194 = vmatprep.subr.bf16.mxu0 0
  %2195 = vmatpush1.bf16.msra.mxu0 %v2186
  %2196 = vmatprep.subr.bf16.mxu0 0
  %2197 = vmatpush1.bf16.msra.mxu0 0
  %2198 = vmatprep.subr.bf16.mxu0 0
  %2199 = vmatpush1.bf16.msra.mxu0 0
  %2200 = vmatprep.subr.bf16.mxu0 0
  %2201 = vmatpush1.bf16.msra.mxu0 0
  %2202 = vmatprep.subr.bf16.mxu0 0
  %2203 = vmatpush1.bf16.msra.mxu0 0
  %2204 = vmatprep.subr.bf16.mxu0 0
  %2205 = vmatpush1.bf16.msra.mxu0 0
  %2206 = vmatprep.subr.bf16.mxu0 0
  %2207 = vmatpush1.bf16.msra.mxu0 0
  %2208 = vmatprep.subr.bf16.mxu0 0
  %2209 = vmatpush1.bf16.msra.mxu0 0
  %2210 = vmatprep.subr.bf16.mxu0 0
  %2211 = vmatpush1.bf16.msra.mxu0 0
  %2212 = vmatprep.subr.bf16.mxu0 0
  %2213 = vmatpush1.bf16.msra.mxu0 0
  %2214 = vmatprep.subr.bf16.mxu0 0
  %2215 = vmatpush1.bf16.msra.mxu0 0
  %2216 = vmatprep.subr.bf16.mxu0 0
  %2217 = vmatpush1.bf16.msra.mxu0 0
  %2218 = vmatprep.subr.bf16.mxu0 0
  %2219 = vmatpush1.bf16.msra.mxu0 0
  %2220 = vmatprep.mubr.bf16.mxu0 0
  %2221 = vmatmul.mubr.bf16.gmra.mrb[0].mxu0 %v1655
  %v2222 = vpop.f32.mrb[0].mxu0
  %v2223 = vadd.f32 0.0, %v2222
  %v2224 = vpop.f32.mrb[0].mxu0
  %v2225 = vpop.f32.mrb[0].mxu0
  %v2226 = vadd.f32 0.0, %v2225
  %v2227 = vpop.f32.mrb[0].mxu0
  %2228 = vdwg.mxu0
  %v2229 = vpack.c.bf16 %v2226, %v2223
  %2230 = vst.msk [vmem:[#allocation3 + $0x38] sm:$0xff] %vm158, %v2229
  %s2231 = scalar_lea.vmem %s5, 224
  %v2232 = vld [vmem:[%s2231] sm:$0xf]
  %v2233 = vld [vmem:[%s2231 + $0x4] sm:$0xf]
  %v2234 = vld [vmem:[%s2231 + $0x8] sm:$0xf]
  %v2235 = vld [vmem:[%s2231 + $0xc] sm:$0xf]
  %v2236 = vld [vmem:[%s2231 + $0x10] sm:$0xf]
  %v2237 = vld [vmem:[%s2231 + $0x14] sm:$0xf]
  %v2238 = vld [vmem:[%s2231 + $0x18] sm:$0x1]
  %v2246 = vunpack.c.l.b16 %v2232
  %v2247 = vunpack.c.l.b16 %v2233
  %v2248 = vunpack.c.l.b16 %v2234
  %v2249 = vunpack.c.l.b16 %v2235
  %v2250 = vunpack.c.l.b16 %v2236
  %v2251 = vunpack.c.l.b16 %v2237
  %v2252 = vunpack.c.l.b16 %v2238
  %v2253 = vpack.c.b16 %v2247, %v2246
  %v2254 = vpack.c.b16 %v2249, %v2248
  %v2255 = vpack.c.b16 %v2251, %v2250
  %v2256 = vpack.c.b16 %v2252, %v2252
  %v2261 = vand.u32 %v2256, %v1659
  %2263 = vmatprep.subr.bf16.mxu0 0
  %2264 = vmatpush1.bf16.msra.mxu0 %v2253
  %2265 = vmatprep.subr.bf16.mxu0 0
  %2266 = vmatpush1.bf16.msra.mxu0 %v2254
  %2267 = vmatprep.subr.bf16.mxu0 0
  %2268 = vmatpush1.bf16.msra.mxu0 %v2255
  %2269 = vmatprep.subr.bf16.mxu0 0
  %2270 = vmatpush1.bf16.msra.mxu0 %v2261
  %2271 = vmatprep.subr.bf16.mxu0 0
  %2272 = vmatpush1.bf16.msra.mxu0 0
  %2273 = vmatprep.subr.bf16.mxu0 0
  %2274 = vmatpush1.bf16.msra.mxu0 0
  %2275 = vmatprep.subr.bf16.mxu0 0
  %2276 = vmatpush1.bf16.msra.mxu0 0
  %2277 = vmatprep.subr.bf16.mxu0 0
  %2278 = vmatpush1.bf16.msra.mxu0 0
  %2279 = vmatprep.subr.bf16.mxu0 0
  %2280 = vmatpush1.bf16.msra.mxu0 0
  %2281 = vmatprep.subr.bf16.mxu0 0
  %2282 = vmatpush1.bf16.msra.mxu0 0
  %2283 = vmatprep.subr.bf16.mxu0 0
  %2284 = vmatpush1.bf16.msra.mxu0 0
  %2285 = vmatprep.subr.bf16.mxu0 0
  %2286 = vmatpush1.bf16.msra.mxu0 0
  %2287 = vmatprep.subr.bf16.mxu0 0
  %2288 = vmatpush1.bf16.msra.mxu0 0
  %2289 = vmatprep.subr.bf16.mxu0 0
  %2290 = vmatpush1.bf16.msra.mxu0 0
  %2291 = vmatprep.subr.bf16.mxu0 0
  %2292 = vmatpush1.bf16.msra.mxu0 0
  %2293 = vmatprep.subr.bf16.mxu0 0
  %2294 = vmatpush1.bf16.msra.mxu0 0
  %2295 = vmatprep.mubr.bf16.mxu0 0
  %2296 = vmatmul.mubr.bf16.gmra.mrb[0].mxu0 %v1655
  %v2297 = vpop.f32.mrb[0].mxu0
  %v2298 = vadd.f32 0.0, %v2297
  %v2299 = vpop.f32.mrb[0].mxu0
  %v2300 = vpop.f32.mrb[0].mxu0
  %v2301 = vadd.f32 0.0, %v2300
  %v2302 = vpop.f32.mrb[0].mxu0
  %2303 = vdwg.mxu0
  %v2304 = vpack.c.bf16 %v2301, %v2298
  %2305 = vst.msk [vmem:[#allocation3 + $0x40] sm:$0xff] %vm158, %v2304
  %v2306 = vld [vmem:[#allocation3] sm:$0xff]
  %v2307 = vld [vmem:[#allocation3 + $0x8] sm:$0xff]
  %v2308 = vld [vmem:[#allocation3 + $0x10] sm:$0xff]
  %v2309 = vld [vmem:[#allocation3 + $0x18] sm:$0xff]
  %v2310 = vld [vmem:[#allocation3 + $0x20] sm:$0xff]
  %v2311 = vld [vmem:[#allocation3 + $0x28] sm:$0xff]
  %v2312 = vld [vmem:[#allocation3 + $0x30] sm:$0xff]
  %v2313 = vld [vmem:[#allocation3 + $0x38] sm:$0xff]
  %v2314 = vld [vmem:[#allocation3 + $0x40] sm:$0xff]
  %2316 = vset.pattern.permute.xlu0 0
  %2317 = vperm.xlu0 %2316, %v1623
  %v2318 = vpop.permute.xlu0 %2317
  %2321 = vset.pattern.permute.xlu0 0
  %2322 = vperm.xlu0 %2321, %v1624
  %v2323 = vpop.permute.xlu0 %2322
  %v2327 = vunpack.c.l.b16 %v1620
  %v2328 = vunpack.c.h.b16 %v1620
  %v2329 = vunpack.c.l.b16 %v1621
  %v2330 = vunpack.c.h.b16 %v1621
  %v2331 = vpack.c.b16 %v2329, %v2327
  %v2332 = vpack.c.b16 %v2330, %v2328
  %v2335 = vsel %vm158, %v2332, 0
  %2337 = vmatprep.subr.bf16.mxu0 0
  %2338 = vmatpush1.bf16.msra.mxu0 %v2306
  %2339 = vmatprep.subr.bf16.mxu0 0
  %2340 = vmatpush1.bf16.msra.mxu0 %v2307
  %2341 = vmatprep.subr.bf16.mxu0 0
  %2342 = vmatpush1.bf16.msra.mxu0 %v2308
  %2343 = vmatprep.subr.bf16.mxu0 0
  %2344 = vmatpush1.bf16.msra.mxu0 %v2309
  %2345 = vmatprep.subr.bf16.mxu0 0
  %2346 = vmatpush1.bf16.msra.mxu0 %v2310
  %2347 = vmatprep.subr.bf16.mxu0 0
  %2348 = vmatpush1.bf16.msra.mxu0 %v2311
  %2349 = vmatprep.subr.bf16.mxu0 0
  %2350 = vmatpush1.bf16.msra.mxu0 %v2312
  %2351 = vmatprep.subr.bf16.mxu0 0
  %2352 = vmatpush1.bf16.msra.mxu0 %v2313
  %2353 = vmatprep.subr.bf16.mxu0 0
  %2354 = vmatpush1.bf16.msra.mxu0 %v2314
  %2355 = vmatprep.subr.bf16.mxu0 0
  %2356 = vmatpush1.bf16.msra.mxu0 0
  %2357 = vmatprep.subr.bf16.mxu0 0
  %2358 = vmatpush1.bf16.msra.mxu0 0
  %2359 = vmatprep.subr.bf16.mxu0 0
  %2360 = vmatpush1.bf16.msra.mxu0 0
  %2361 = vmatprep.subr.bf16.mxu0 0
  %2362 = vmatpush1.bf16.msra.mxu0 0
  %2363 = vmatprep.subr.bf16.mxu0 0
  %2364 = vmatpush1.bf16.msra.mxu0 0
  %2365 = vmatprep.subr.bf16.mxu0 0
  %2366 = vmatpush1.bf16.msra.mxu0 0
  %2367 = vmatprep.subr.bf16.mxu0 0
  %2368 = vmatpush1.bf16.msra.mxu0 0
  %2369 = vmatprep.mubr.bf16.mxu0 %v2335
  %2370 = vmatmul.mubr.bf16.gmra.mrb[0].mxu0 %v2331
  %v2371 = vpop.f32.mrb[0].mxu0
  %v2372 = vadd.f32 %v2318, %v2371
  %v2373 = vpop.f32.mrb[0].mxu0
  %v2374 = vpop.f32.mrb[0].mxu0
  %v2375 = vadd.f32 %v2323, %v2374
  %v2376 = vpop.f32.mrb[0].mxu0
  %2377 = vdwg.mxu0
  %v2378 = vmax.f32 %v2372, 0.0
  %v2379 = vmax.f32 %v2375, 0.0
  %v2380 = vpack.c.bf16 %v2379, %v2378
  %v2381 = vld [vmem:[%s6] sm:$0xff]
  %v2382 = vld [vmem:[%s6 + $0x8] sm:$0xff]
  %v2383 = vld [vmem:[%s6 + $0x10] sm:$0xff]
  %v2384 = vld [vmem:[%s6 + $0x18] sm:$0xf]
  %v2385 = vld [vmem:[%s6 + $0x1c] sm:$0xff]
  %v2386 = vld [vmem:[%s6 + $0x24] sm:$0xff]
  %v2387 = vld [vmem:[%s6 + $0x2c] sm:$0xff]
  %v2388 = vld [vmem:[%s6 + $0x34] sm:$0xf]
  %v2397 = vunpack.c.l.b16 %v2381
  %v2398 = vunpack.c.h.b16 %v2381
  %v2399 = vunpack.c.l.b16 %v2382
  %v2400 = vunpack.c.h.b16 %v2382
  %v2401 = vunpack.c.l.b16 %v2383
  %v2402 = vunpack.c.h.b16 %v2383
  %v2403 = vunpack.c.l.b16 %v2384
  %v2404 = vunpack.c.l.b16 %v2385
  %v2405 = vunpack.c.h.b16 %v2385
  %v2406 = vunpack.c.l.b16 %v2386
  %v2407 = vunpack.c.h.b16 %v2386
  %v2408 = vunpack.c.l.b16 %v2387
  %v2409 = vunpack.c.h.b16 %v2387
  %v2410 = vunpack.c.l.b16 %v2388
  %v2411 = vpack.c.b16 %v2404, %v2397
  %v2412 = vpack.c.b16 %v2405, %v2398
  %v2413 = vpack.c.b16 %v2406, %v2399
  %v2414 = vpack.c.b16 %v2407, %v2400
  %v2415 = vpack.c.b16 %v2408, %v2401
  %v2416 = vpack.c.b16 %v2409, %v2402
  %v2417 = vpack.c.b16 %v2410, %v2403
  %v2426 = vsel %vm158, %v2380, 0
  %2428 = vmatprep.subr.bf16.mxu0 %v2412
  %2429 = vmatpush1.bf16.msra.mxu0 %v2411
  %2430 = vmatprep.subr.bf16.mxu0 0
  %2431 = vmatpush1.bf16.msra.mxu0 0
  %2432 = vmatprep.subr.bf16.mxu0 0
  %2433 = vmatpush1.bf16.msra.mxu0 0
  %2434 = vmatprep.subr.bf16.mxu0 0
  %2435 = vmatpush1.bf16.msra.mxu0 0
  %2436 = vmatprep.subr.bf16.mxu0 0
  %2437 = vmatpush1.bf16.msra.mxu0 0
  %2438 = vmatprep.subr.bf16.mxu0 0
  %2439 = vmatpush1.bf16.msra.mxu0 0
  %2440 = vmatprep.subr.bf16.mxu0 0
  %2441 = vmatpush1.bf16.msra.mxu0 0
  %2442 = vmatprep.subr.bf16.mxu0 0
  %2443 = vmatpush1.bf16.msra.mxu0 0
  %2444 = vmatprep.subr.bf16.mxu0 0
  %2445 = vmatpush1.bf16.msra.mxu0 0
  %2446 = vmatprep.subr.bf16.mxu0 0
  %2447 = vmatpush1.bf16.msra.mxu0 0
  %2448 = vmatprep.subr.bf16.mxu0 0
  %2449 = vmatpush1.bf16.msra.mxu0 0
  %2450 = vmatprep.subr.bf16.mxu0 0
  %2451 = vmatpush1.bf16.msra.mxu0 0
  %2452 = vmatprep.subr.bf16.mxu0 0
  %2453 = vmatpush1.bf16.msra.mxu0 0
  %2454 = vmatprep.subr.bf16.mxu0 0
  %2455 = vmatpush1.bf16.msra.mxu0 0
  %2456 = vmatprep.subr.bf16.mxu0 0
  %2457 = vmatpush1.bf16.msra.mxu0 0
  %2458 = vmatprep.subr.bf16.mxu0 0
  %2459 = vmatpush1.bf16.msra.mxu0 0
  %2460 = vmatprep.mubr.bf16.mxu0 0
  %2461 = vmatmul.mubr.bf16.gmra.mrb[0].mxu0 %v2426
  %v2462 = vpop.f32.mrb[0].mxu0
  %v2463 = vadd.f32 0.0, %v2462
  %v2464 = vpop.f32.mrb[0].mxu0
  %v2465 = vadd.f32 0.0, %v2464
  %v2466 = vpop.f32.mrb[0].mxu0
  %v2467 = vadd.f32 0.0, %v2466
  %v2468 = vpop.f32.mrb[0].mxu0
  %v2469 = vadd.f32 0.0, %v2468
  %2470 = vdwg.mxu0
  %2471 = vmatprep.subr.bf16.mxu0 %v2414
  %2472 = vmatpush1.bf16.msra.mxu0 %v2413
  %2473 = vmatprep.subr.bf16.mxu0 0
  %2474 = vmatpush1.bf16.msra.mxu0 0
  %2475 = vmatprep.subr.bf16.mxu0 0
  %2476 = vmatpush1.bf16.msra.mxu0 0
  %2477 = vmatprep.subr.bf16.mxu0 0
  %2478 = vmatpush1.bf16.msra.mxu0 0
  %2479 = vmatprep.subr.bf16.mxu0 0
  %2480 = vmatpush1.bf16.msra.mxu0 0
  %2481 = vmatprep.subr.bf16.mxu0 0
  %2482 = vmatpush1.bf16.msra.mxu0 0
  %2483 = vmatprep.subr.bf16.mxu0 0
  %2484 = vmatpush1.bf16.msra.mxu0 0
  %2485 = vmatprep.subr.bf16.mxu0 0
  %2486 = vmatpush1.bf16.msra.mxu0 0
  %2487 = vmatprep.subr.bf16.mxu0 0
  %2488 = vmatpush1.bf16.msra.mxu0 0
  %2489 = vmatprep.subr.bf16.mxu0 0
  %2490 = vmatpush1.bf16.msra.mxu0 0
  %2491 = vmatprep.subr.bf16.mxu0 0
  %2492 = vmatpush1.bf16.msra.mxu0 0
  %2493 = vmatprep.subr.bf16.mxu0 0
  %2494 = vmatpush1.bf16.msra.mxu0 0
  %2495 = vmatprep.subr.bf16.mxu0 0
  %2496 = vmatpush1.bf16.msra.mxu0 0
  %2497 = vmatprep.subr.bf16.mxu0 0
  %2498 = vmatpush1.bf16.msra.mxu0 0
  %2499 = vmatprep.subr.bf16.mxu0 0
  %2500 = vmatpush1.bf16.msra.mxu0 0
  %2501 = vmatprep.subr.bf16.mxu0 0
  %2502 = vmatpush1.bf16.msra.mxu0 0
  %2503 = vmatprep.mubr.bf16.mxu0 0
  %2504 = vmatmul.mubr.bf16.gmra.mrb[0].mxu0 %v2426
  %v2505 = vpop.f32.mrb[0].mxu0
  %v2506 = vadd.f32 0.0, %v2505
  %v2507 = vpop.f32.mrb[0].mxu0
  %v2508 = vadd.f32 0.0, %v2507
  %v2509 = vpop.f32.mrb[0].mxu0
  %v2510 = vadd.f32 0.0, %v2509
  %v2511 = vpop.f32.mrb[0].mxu0
  %v2512 = vadd.f32 0.0, %v2511
  %2513 = vdwg.mxu0
  %2514 = vmatprep.subr.bf16.mxu0 %v2416
  %2515 = vmatpush1.bf16.msra.mxu0 %v2415
  %2516 = vmatprep.subr.bf16.mxu0 0
  %2517 = vmatpush1.bf16.msra.mxu0 0
  %2518 = vmatprep.subr.bf16.mxu0 0
  %2519 = vmatpush1.bf16.msra.mxu0 0
  %2520 = vmatprep.subr.bf16.mxu0 0
  %2521 = vmatpush1.bf16.msra.mxu0 0
  %2522 = vmatprep.subr.bf16.mxu0 0
  %2523 = vmatpush1.bf16.msra.mxu0 0
  %2524 = vmatprep.subr.bf16.mxu0 0
  %2525 = vmatpush1.bf16.msra.mxu0 0
  %2526 = vmatprep.subr.bf16.mxu0 0
  %2527 = vmatpush1.bf16.msra.mxu0 0
  %2528 = vmatprep.subr.bf16.mxu0 0
  %2529 = vmatpush1.bf16.msra.mxu0 0
  %2530 = vmatprep.subr.bf16.mxu0 0
  %2531 = vmatpush1.bf16.msra.mxu0 0
  %2532 = vmatprep.subr.bf16.mxu0 0
  %2533 = vmatpush1.bf16.msra.mxu0 0
  %2534 = vmatprep.subr.bf16.mxu0 0
  %2535 = vmatpush1.bf16.msra.mxu0 0
  %2536 = vmatprep.subr.bf16.mxu0 0
  %2537 = vmatpush1.bf16.msra.mxu0 0
  %2538 = vmatprep.subr.bf16.mxu0 0
  %2539 = vmatpush1.bf16.msra.mxu0 0
  %2540 = vmatprep.subr.bf16.mxu0 0
  %2541 = vmatpush1.bf16.msra.mxu0 0
  %2542 = vmatprep.subr.bf16.mxu0 0
  %2543 = vmatpush1.bf16.msra.mxu0 0
  %2544 = vmatprep.subr.bf16.mxu0 0
  %2545 = vmatpush1.bf16.msra.mxu0 0
  %2546 = vmatprep.mubr.bf16.mxu0 0
  %2547 = vmatmul.mubr.bf16.gmra.mrb[0].mxu0 %v2426
  %v2548 = vpop.f32.mrb[0].mxu0
  %v2549 = vadd.f32 0.0, %v2548
  %v2550 = vpop.f32.mrb[0].mxu0
  %v2551 = vadd.f32 0.0, %v2550
  %v2552 = vpop.f32.mrb[0].mxu0
  %v2553 = vadd.f32 0.0, %v2552
  %v2554 = vpop.f32.mrb[0].mxu0
  %v2555 = vadd.f32 0.0, %v2554
  %2556 = vdwg.mxu0
  %2557 = vmatprep.subr.bf16.mxu0 0
  %2558 = vmatpush1.bf16.msra.mxu0 %v2417
  %2559 = vmatprep.subr.bf16.mxu0 0
  %2560 = vmatpush1.bf16.msra.mxu0 0
  %2561 = vmatprep.subr.bf16.mxu0 0
  %2562 = vmatpush1.bf16.msra.mxu0 0
  %2563 = vmatprep.subr.bf16.mxu0 0
  %2564 = vmatpush1.bf16.msra.mxu0 0
  %2565 = vmatprep.subr.bf16.mxu0 0
  %2566 = vmatpush1.bf16.msra.mxu0 0
  %2567 = vmatprep.subr.bf16.mxu0 0
  %2568 = vmatpush1.bf16.msra.mxu0 0
  %2569 = vmatprep.subr.bf16.mxu0 0
  %2570 = vmatpush1.bf16.msra.mxu0 0
  %2571 = vmatprep.subr.bf16.mxu0 0
  %2572 = vmatpush1.bf16.msra.mxu0 0
  %2573 = vmatprep.subr.bf16.mxu0 0
  %2574 = vmatpush1.bf16.msra.mxu0 0
  %2575 = vmatprep.subr.bf16.mxu0 0
  %2576 = vmatpush1.bf16.msra.mxu0 0
  %2577 = vmatprep.subr.bf16.mxu0 0
  %2578 = vmatpush1.bf16.msra.mxu0 0
  %2579 = vmatprep.subr.bf16.mxu0 0
  %2580 = vmatpush1.bf16.msra.mxu0 0
  %2581 = vmatprep.subr.bf16.mxu0 0
  %2582 = vmatpush1.bf16.msra.mxu0 0
  %2583 = vmatprep.subr.bf16.mxu0 0
  %2584 = vmatpush1.bf16.msra.mxu0 0
  %2585 = vmatprep.subr.bf16.mxu0 0
  %2586 = vmatpush1.bf16.msra.mxu0 0
  %2587 = vmatprep.subr.bf16.mxu0 0
  %2588 = vmatpush1.bf16.msra.mxu0 0
  %2589 = vmatprep.mubr.bf16.mxu0 0
  %2590 = vmatmul.mubr.bf16.gmra.mrb[0].mxu0 %v2426
  %v2591 = vpop.f32.mrb[0].mxu0
  %v2592 = vadd.f32 0.0, %v2591
  %v2593 = vpop.f32.mrb[0].mxu0
  %v2594 = vpop.f32.mrb[0].mxu0
  %v2595 = vadd.f32 0.0, %v2594
  %v2596 = vpop.f32.mrb[0].mxu0
  %2597 = vdwg.mxu0
  %v2598 = vxor.u32 %v2463, 2147483648
  %v2599 = vxor.u32 %v2465, 2147483648
  %v2600 = vxor.u32 %v2506, 2147483648
  %v2601 = vxor.u32 %v2508, 2147483648
  %v2602 = vxor.u32 %v2549, 2147483648
  %v2603 = vxor.u32 %v2551, 2147483648
  %v2604 = vxor.u32 %v2592, 2147483648
  %v2605 = vxor.u32 %v2467, 2147483648
  %v2606 = vxor.u32 %v2469, 2147483648
  %v2607 = vxor.u32 %v2510, 2147483648
  %v2608 = vxor.u32 %v2512, 2147483648
  %v2609 = vxor.u32 %v2553, 2147483648
  %v2610 = vxor.u32 %v2555, 2147483648
  %v2611 = vxor.u32 %v2595, 2147483648
  %v2612 = vmul.f32 %v2598, 1.442695
  %v2613 = vpow.pop %v2612
  %v2614 = vmul.f32 %v2599, 1.442695
  %v2615 = vpow.pop %v2614
  %v2616 = vmul.f32 %v2600, 1.442695
  %v2617 = vpow.pop %v2616
  %v2618 = vmul.f32 %v2601, 1.442695
  %v2619 = vpow.pop %v2618
  %v2620 = vmul.f32 %v2602, 1.442695
  %v2621 = vpow.pop %v2620
  %v2622 = vmul.f32 %v2603, 1.442695
  %v2623 = vpow.pop %v2622
  %v2624 = vmul.f32 %v2604, 1.442695
  %v2625 = vpow.pop %v2624
  %v2626 = vmul.f32 %v2605, 1.442695
  %v2627 = vpow.pop %v2626
  %v2628 = vmul.f32 %v2606, 1.442695
  %v2629 = vpow.pop %v2628
  %v2630 = vmul.f32 %v2607, 1.442695
  %v2631 = vpow.pop %v2630
  %v2632 = vmul.f32 %v2608, 1.442695
  %v2633 = vpow.pop %v2632
  %v2634 = vmul.f32 %v2609, 1.442695
  %v2635 = vpow.pop %v2634
  %v2636 = vmul.f32 %v2610, 1.442695
  %v2637 = vpow.pop %v2636
  %v2638 = vmul.f32 %v2611, 1.442695
  %v2639 = vpow.pop %v2638
  %v2640 = vadd.f32 %v2613, 1.0
  %v2641 = vadd.f32 %v2615, 1.0
  %v2642 = vadd.f32 %v2617, 1.0
  %v2643 = vadd.f32 %v2619, 1.0
  %v2644 = vadd.f32 %v2621, 1.0
  %v2645 = vadd.f32 %v2623, 1.0
  %v2646 = vadd.f32 %v2625, 1.0
  %v2647 = vadd.f32 %v2627, 1.0
  %v2648 = vadd.f32 %v2629, 1.0
  %v2649 = vadd.f32 %v2631, 1.0
  %v2650 = vadd.f32 %v2633, 1.0
  %v2651 = vadd.f32 %v2635, 1.0
  %v2652 = vadd.f32 %v2637, 1.0
  %v2653 = vadd.f32 %v2639, 1.0
  %v2654 = vrcp.pop %v2640
  %v2655 = vmul.f32 1.0, %v2654
  %v2656 = vrcp.pop %v2641
  %v2657 = vmul.f32 1.0, %v2656
  %v2658 = vrcp.pop %v2642
  %v2659 = vmul.f32 1.0, %v2658
  %v2660 = vrcp.pop %v2643
  %v2661 = vmul.f32 1.0, %v2660
  %v2662 = vrcp.pop %v2644
  %v2663 = vmul.f32 1.0, %v2662
  %v2664 = vrcp.pop %v2645
  %v2665 = vmul.f32 1.0, %v2664
  %v2666 = vrcp.pop %v2646
  %v2667 = vmul.f32 1.0, %v2666
  %v2668 = vrcp.pop %v2647
  %v2669 = vmul.f32 1.0, %v2668
  %v2670 = vrcp.pop %v2648
  %v2671 = vmul.f32 1.0, %v2670
  %v2672 = vrcp.pop %v2649
  %v2673 = vmul.f32 1.0, %v2672
  %v2674 = vrcp.pop %v2650
  %v2675 = vmul.f32 1.0, %v2674
  %v2676 = vrcp.pop %v2651
  %v2677 = vmul.f32 1.0, %v2676
  %v2678 = vrcp.pop %v2652
  %v2679 = vmul.f32 1.0, %v2678
  %v2680 = vrcp.pop %v2653
  %v2681 = vmul.f32 1.0, %v2680
  %v2682 = vld [vmem:[%s1] sm:$0xff]
  %v2683 = vld [vmem:[%s1 + $0x8] sm:$0xff]
  %v2684 = vld [vmem:[%s1 + $0x10] sm:$0xff]
  %v2685 = vld [vmem:[%s1 + $0x18] sm:$0xff]
  %v2686 = vld [vmem:[%s1 + $0x20] sm:$0xff]
  %v2687 = vld [vmem:[%s1 + $0x28] sm:$0xff]
  %v2688 = vld [vmem:[%s1 + $0x30] sm:$0xff]
  %v2689 = vld [vmem:[%s1 + $0x38] sm:$0xff]
  %v2690 = vld [vmem:[%s1 + $0x40] sm:$0xff]
  %v2691 = vld [vmem:[%s1 + $0x48] sm:$0xff]
  %v2692 = vld [vmem:[%s1 + $0x50] sm:$0xff]
  %v2693 = vld [vmem:[%s1 + $0x58] sm:$0xff]
  %v2694 = vld [vmem:[%s1 + $0x60] sm:$0xff]
  %v2695 = vld [vmem:[%s1 + $0x68] sm:$0xff]
  %v2696 = vadd.f32 %v2655, 1.0
  %v2697 = vadd.f32 %v2657, 1.0
  %v2698 = vadd.f32 %v2659, 1.0
  %v2699 = vadd.f32 %v2661, 1.0
  %v2700 = vadd.f32 %v2663, 1.0
  %v2701 = vadd.f32 %v2665, 1.0
  %v2702 = vadd.f32 %v2667, 1.0
  %v2703 = vadd.f32 %v2669, 1.0
  %v2704 = vadd.f32 %v2671, 1.0
  %v2705 = vadd.f32 %v2673, 1.0
  %v2706 = vadd.f32 %v2675, 1.0
  %v2707 = vadd.f32 %v2677, 1.0
  %v2708 = vadd.f32 %v2679, 1.0
  %v2709 = vadd.f32 %v2681, 1.0
  %v2710 = vmul.f32 %v2682, %v2696
  %v2711 = vmul.f32 %v2683, %v2697
  %v2712 = vmul.f32 %v2684, %v2698
  %v2713 = vmul.f32 %v2685, %v2699
  %v2714 = vmul.f32 %v2686, %v2700
  %v2715 = vmul.f32 %v2687, %v2701
  %v2716 = vmul.f32 %v2688, %v2702
  %v2717 = vmul.f32 %v2689, %v2703
  %v2718 = vmul.f32 %v2690, %v2704
  %v2719 = vmul.f32 %v2691, %v2705
  %v2720 = vmul.f32 %v2692, %v2706
  %v2721 = vmul.f32 %v2693, %v2707
  %v2722 = vmul.f32 %v2694, %v2708
  %v2723 = vmul.f32 %v2695, %v2709
  %2724 = vst [vmem:[%s7] sm:$0xff] %v2710
  %2725 = vst [vmem:[%s7 + $0x8] sm:$0xff] %v2711
  %2726 = vst [vmem:[%s7 + $0x10] sm:$0xff] %v2712
  %2727 = vst [vmem:[%s7 + $0x18] sm:$0xff] %v2713
  %2728 = vst [vmem:[%s7 + $0x20] sm:$0xff] %v2714
  %2729 = vst [vmem:[%s7 + $0x28] sm:$0xff] %v2715
  %2730 = vst.msk [vmem:[%s7 + $0x30] sm:$0xff] %vm158, %v2716
  %2731 = vst [vmem:[%s7 + $0x38] sm:$0xff] %v2717
  %2732 = vst [vmem:[%s7 + $0x40] sm:$0xff] %v2718
  %2733 = vst [vmem:[%s7 + $0x48] sm:$0xff] %v2719
  %2734 = vst [vmem:[%s7 + $0x50] sm:$0xff] %v2720
  %2735 = vst [vmem:[%s7 + $0x58] sm:$0xff] %v2721
  %2736 = vst [vmem:[%s7 + $0x60] sm:$0xff] %v2722
  %2737 = vst.msk [vmem:[%s7 + $0x68] sm:$0xff] %vm158, %v2723
  // Predicated region
  $region30: #{gemodule_forward.1} parent=0 // pred_check
    _
  $region31: #{gemodule_forward.1} parent=0 // pred_check_branch
    %2739 = sbr.rel (0) target = $region33
  $region32: #{gemodule_forward.1} parent=0 // pred_region
    _
  $region33: #{gemodule_forward.1} parent=0 // pred_fallthru
    _
  // Predicated region
  $region34: #{gemodule_forward.1} parent=0 // pred_check
    _
  $region35: #{gemodule_forward.1} parent=0 // pred_check_branch
    %2741 = sbr.rel (0) target = $region37
  $region36: #{gemodule_forward.1} parent=0 // pred_region
    _
  $region37: #{gemodule_forward.1} parent=0 // pred_fallthru
    _

</llo_original>
